<compile_context>
chip_gen: v7x
topology: tpu7x:2x2x1
jax: 0.10.0
libtpu: 0.0.40
codegen_flags: <defaults>
</compile_context>

<pallas_src>
import functools

import jax
import jax.numpy as jnp
from jax import lax
from jax.experimental import pallas as pl
from jax.experimental.pallas import tpu as pltpu


# ---------------------------------------------------------------------------
# Kernels
# ---------------------------------------------------------------------------
def ffn_bn_resident_kernel(x_ref, w1_ref, b1_ref, w2_ref, b2_ref, o_ref, acc_ref,
                           *, tf, n_chunks):
    """Weights fully resident in VMEM; d_ff processed in tf-wide chunks so the
    (tm, d_ff) intermediate never materializes in full."""
    x = x_ref[...]
    xb = x.astype(jnp.bfloat16)                          # bf16 operands into the MXU
    acc_ref[...] = jnp.zeros_like(acc_ref)

    def chunk(off):
        h = jnp.dot(xb, w1_ref[:, pl.ds(off, tf)],
                    preferred_element_type=jnp.float32)  # fc1 chunk (BN pre-folded)
        h = jnp.maximum(h + b1_ref[:, pl.ds(off, tf)], 0.0)   # bias + ReLU in f32 (VPU)
        acc_ref[...] += jnp.dot(h.astype(jnp.bfloat16), w2_ref[pl.ds(off, tf), :],
                                preferred_element_type=jnp.float32)

    if n_chunks <= 16:                                   # static offsets -> static slices
        for c in range(n_chunks):
            chunk(c * tf)
    else:                                                # very large d_ff: dynamic, aligned
        def body(c, carry):
            chunk(pl.multiple_of(c * tf, tf))
            return carry
        lax.fori_loop(0, n_chunks, body, 0)

    o_ref[...] = (acc_ref[...] + b2_ref[...] + x).astype(o_ref.dtype)


def ffn_bn_streamed_kernel(x_ref, w1_ref, b1_ref, w2_ref, b2_ref, o_ref, acc_ref):
    """Weights streamed from HBM one (d_model, tf)/(tf, d_model) block per step along an
    'arbitrary' d_ff grid axis; f32 accumulator carried across that axis."""
    k = pl.program_id(1)

    @pl.when(k == 0)
    def _init():
        acc_ref[...] = jnp.zeros_like(acc_ref)

    xb = x_ref[...].astype(jnp.bfloat16)
    h = jnp.dot(xb, w1_ref[...], preferred_element_type=jnp.float32)
    h = jnp.maximum(h + b1_ref[...], 0.0)
    acc_ref[...] += jnp.dot(h.astype(jnp.bfloat16), w2_ref[...],
                            preferred_element_type=jnp.float32)

    @pl.when(k == pl.num_programs(1) - 1)
    def _finalize():
        o_ref[...] = (acc_ref[...] + b2_ref[...] + x_ref[...]).astype(o_ref.dtype)


# ---------------------------------------------------------------------------
# Hardware queries & tile choices
# ---------------------------------------------------------------------------
def _vmem_capacity_bytes():
    try:
        cap = int(pltpu.get_tpu_info().vmem_capacity_bytes)
        if cap > 0:
            return cap
    except Exception:
        pass
    return 64 * 1024 * 1024        # conservative floor (v7x per-TensorCore VMEM)


def _num_tensorcores():
    try:
        info = pltpu.get_tpu_info()
        for name in ("num_cores", "core_count", "num_tensorcores", "tensorcore_count"):
            v = getattr(info, name, None)
            if isinstance(v, int) and v > 0:
                return v
    except Exception:
        pass
    return 2                        # assume megacore-capable; only affects tile choice


def _choose_tm(n_rows, tm, num_tc):
    """Row tile: large & 8-aligned; on multi-TensorCore parts prefer an EVEN number of grid
    steps so the 'parallel' row axis splits evenly across cores."""
    tm = max(8, min(tm, n_rows))
    if tm < n_rows:
        tm = max(8, (tm // 8) * 8)
    steps = -(-n_rows // tm)
    if num_tc > 1 and steps % 2 == 1:
        new_tm = -(-n_rows // (steps + 1))
        new_tm = max(8, ((new_tm + 7) // 8) * 8)
        if (-(-n_rows // new_tm)) % 2 == 0:
            tm = new_tm
    return tm


def _choose_tf(d_ff, tf_target=512):
    """d_ff chunk width: a multiple of 128 that divides d_ff, as close to tf_target as possible
    (bounds the live (tm, tf) intermediate while keeping an MXU-friendly K)."""
    if d_ff % 128 != 0:
        return d_ff                 # unusual size: process d_ff in one piece
    cands = [c for c in range(128, d_ff + 1, 128) if d_ff % c == 0]
    below = [c for c in cands if c <= tf_target]
    return max(below) if below else min(cands)


# ---------------------------------------------------------------------------
# pallas_call builder & forward wrapper
# ---------------------------------------------------------------------------
def _ffn_pallas_call(x2d, w1, b1, w2, b2, *, tm, tf, streamed, single_buffer, vmem_limit):
    N, d_model = x2d.shape
    d_ff = w1.shape[1]
    n_row = pl.cdiv(N, tm)
    n_chunks = pl.cdiv(d_ff, tf)

    def const_spec(shape, index_map):
        # Constant index_map -> single-buffer to halve its VMEM footprint.
        if single_buffer:
            return pl.BlockSpec(shape, index_map, pipeline_mode=pl.Buffered(1))
        return pl.BlockSpec(shape, index_map)

    cost = pl.CostEstimate(
        flops=4 * N * d_model * d_ff,                         # two matmuls, 2 flops / MAC
        transcendentals=0,
        bytes_accessed=(2 * N * d_model * 4                   # x in + y out (f32)
                        + (n_row if streamed else 1) * 2 * d_model * d_ff * 2
                        + (d_ff + d_model) * 4),
    )

    if not streamed:
        kernel = functools.partial(ffn_bn_resident_kernel, tf=tf, n_chunks=n_chunks)
        grid = (n_row,)
        in_specs = [
            pl.BlockSpec((tm, d_model), lambda i: (i, 0)),    # x row tile
            const_spec((d_model, d_ff), lambda i: (0, 0)),    # W1 (bf16, BN folded), resident
            const_spec((1, d_ff), lambda i: (0, 0)),          # b1 (f32, BN folded)
            const_spec((d_ff, d_model), lambda i: (0, 0)),    # W2 (bf16), resident
            const_spec((1, d_model), lambda i: (0, 0)),       # b2 (f32)
        ]
        out_spec = pl.BlockSpec((tm, d_model), lambda i: (i, 0))
        dims = ("parallel",)
    else:
        kernel = ffn_bn_streamed_kernel
        grid = (n_row, n_chunks)
        in_specs = [
            pl.BlockSpec((tm, d_model), lambda i, k: (i, 0)),  # x rows (resident across k)
            pl.BlockSpec((d_model, tf), lambda i, k: (0, k)),  # W1 column block (streamed)
            pl.BlockSpec((1, tf), lambda i, k: (0, k)),        # b1 block
            pl.BlockSpec((tf, d_model), lambda i, k: (k, 0)),  # W2 row block (streamed)
            const_spec((1, d_model), lambda i, k: (0, 0)),     # b2 (constant)
        ]
        out_spec = pl.BlockSpec((tm, d_model), lambda i, k: (i, 0))
        dims = ("parallel", "arbitrary")

    return pl.pallas_call(
        kernel,
        out_shape=jax.ShapeDtypeStruct((N, d_model), x2d.dtype),
        grid_spec=pltpu.PrefetchScalarGridSpec(
            num_scalar_prefetch=0,
            grid=grid,
            in_specs=in_specs,
            out_specs=out_spec,
            scratch_shapes=[pltpu.VMEM((tm, d_model), jnp.float32)],   # f32 accumulator
        ),
        compiler_params=pltpu.CompilerParams(
            dimension_semantics=dims,
            vmem_limit_bytes=vmem_limit,
        ),
        cost_estimate=cost,
    )(x2d, w1, b1, w2, b2)


def ffn_bn_forward(x, params, *, tm=512, tf=512, force_stream=False):
    """x: (B, S, d_model) float32.  params: prepared (bf16 W1/W2, BN-folded f32 b1/b2)."""
    B, S, d_model = x.shape
    w1, b1, w2, b2 = params
    d_ff = w1.shape[1]
    N = B * S
    x2d = x.reshape(N, d_model)

    num_tc = _num_tensorcores()
    tm_eff = _choose_tm(N, tm, num_tc)
    tf_eff = _choose_tf(d_ff, tf)

    cap = _vmem_capacity_bytes()
    act_bytes = (2 * 2 * tm_eff * d_model * 4       # x & out row tiles, double-buffered, f32
                 + tm_eff * d_model * 4             # f32 accumulator scratch
                 + tm_eff * tf_eff * 6)             # live h chunk (f32 + bf16 copy)
    weight_bytes = 2 * d_model * d_ff * 2 + (d_ff + d_model) * 4
    streamed = force_stream or (1.4 * (weight_bytes + act_bytes) > 0.70 * cap)

    if streamed:
        est = (2 * (2 * d_model * tf_eff * 2 + tf_eff * 4)   # streamed W1/W2/b1 blocks, 2-deep
               + 2 * d_model * 4 + act_bytes)
    else:
        est = 2 * weight_bytes + act_bytes                   # conservative (if fallback buffers x2)
    vmem_limit = int(min(max(1.5 * est, 32 * 1024 * 1024), 0.85 * cap))

    def _run(single_buffer):
        out = _ffn_pallas_call(x2d, w1, b1, w2, b2, tm=tm_eff, tf=tf_eff,
                               streamed=streamed, single_buffer=single_buffer,
                               vmem_limit=vmem_limit)
        return jax.block_until_ready(out)

    try:
        out2d = _run(True)          # pl.Buffered(1) on constant weight/bias inputs
    except Exception:               # older jax without pipeline_mode support -> default buffering
        out2d = _run(False)
    return out2d.reshape(B, S, d_model)


# ---------------------------------------------------------------------------
# Parameters & references
# ---------------------------------------------------------------------------
def init_raw_params(key, d_model, d_ff):
    """Deterministic params mirroring the PyTorch module (weights stored pre-transposed)."""
    ks = jax.random.split(key, 8)
    lim1 = 1.0 / jnp.sqrt(d_model)
    lim2 = 1.0 / jnp.sqrt(d_ff)
    w1 = jax.random.uniform(ks[0], (d_model, d_ff), jnp.float32, -lim1, lim1)   # fc1.weight^T
    b1 = jax.random.uniform(ks[1], (d_ff,), jnp.float32, -lim1, lim1)
    w2 = jax.random.uniform(ks[2], (d_ff, d_model), jnp.float32, -lim2, lim2)   # fc2.weight^T
    b2 = jax.random.uniform(ks[3], (d_model,), jnp.float32, -lim2, lim2)
    gamma = 1.0 + 0.1 * jax.random.normal(ks[4], (d_ff,), jnp.float32)
    beta = 0.1 * jax.random.normal(ks[5], (d_ff,), jnp.float32)
    run_mean = 0.1 * jax.random.normal(ks[6], (d_ff,), jnp.float32)
    run_var = jax.random.uniform(ks[7], (d_ff,), jnp.float32, 0.5, 1.5)
    return (w1, b1, w2, b2, gamma, beta, run_mean, run_var)


def prepare_params(raw, eps=1e-5):
    """Fold BatchNorm1d(eval) into fc1 and cast weights to bf16 (done once, on the host)."""
    w1, b1, w2, b2, gamma, beta, run_mean, run_var = raw
    scale = gamma / jnp.sqrt(run_var + eps)            # (d_ff,)
    shift = beta - run_mean * scale
    w1f = w1 * scale[None, :]                          # scale fc1 output channels
    b1f = b1 * scale + shift
    return (w1f.astype(jnp.bfloat16),
            b1f.reshape(1, -1).astype(jnp.float32),
            w2.astype(jnp.bfloat16),
            b2.reshape(1, -1).astype(jnp.float32))


def reference_f32(x, raw, eps=1e-5):
    """Full-precision reference with BN applied explicitly (module semantics, eval mode)."""
    w1, b1, w2, b2, gamma, beta, run_mean, run_var = raw
    h = jnp.einsum("bsd,df->bsf", x, w1) + b1
    h = (h - run_mean) / jnp.sqrt(run_var + eps) * gamma + beta
    h = jax.nn.relu(h)
    return jnp.einsum("bsf,fd->bsd", h, w2) + b2 + x


def reference_matched(x, params):
    """Reference using the same folded/bf16 params and bf16 matmul operands as the kernel."""
    w1, b1, w2, b2 = params
    xb = x.astype(jnp.bfloat16)
    h = jnp.einsum("bsd,df->bsf", xb, w1, preferred_element_type=jnp.float32) + b1[0]
    h = jax.nn.relu(h)
    y = jnp.einsum("bsf,fd->bsd", h.astype(jnp.bfloat16), w2,
                   preferred_element_type=jnp.float32) + b2[0]
    return y + x


# ---------------------------------------------------------------------------
if __name__ == "__main__":
    B, S, d_model, d_ff = 2, 16, 128, 256
    key = jax.random.PRNGKey(0)
    k_x, k_p = jax.random.split(key)
    x = jax.random.normal(k_x, (B, S, d_model), jnp.float32)

    raw = init_raw_params(k_p, d_model, d_ff)
    params = prepare_params(raw)

    ref_m = reference_matched(x, params)      # same folded/bf16 arithmetic -> tight check
    ref_f = reference_f32(x, raw)             # full-f32 module semantics -> loose check (bf16 wts)

    # Resident-weight path: tf=128 -> 2 in-kernel d_ff chunks accumulate into the f32 scratch.
    out_res = jax.block_until_ready(ffn_bn_forward(x, params, tf=128))
    # Streamed-weight path (large-model / v7x fallback), forced here to exercise it: grid (2, 2).
    out_str = jax.block_until_ready(ffn_bn_forward(x, params, tm=16, tf=128, force_stream=True))

    for out in (out_res, out_str):
        assert out.shape == (B, S, d_model)
        assert jnp.max(jnp.abs(out - ref_m)) < 2e-3, "mismatch vs matched-precision reference"
        assert jnp.max(jnp.abs(out - ref_f)) < 5e-2, "mismatch vs full-f32 module reference"
    assert jnp.max(jnp.abs(out_res - out_str)) < 1e-3, "resident vs streamed path mismatch"
    print("KERNEL_OK")
</pallas_src>

<mosaic_0001>
module attributes {stable_mosaic.version = 11 : i64} {
  func.func @ffn_bn_resident_kernel(%arg0: i32, %arg1: memref<16x128xf32, #tpu.memory_space<vmem>>, %arg2: memref<128x256xbf16, #tpu.memory_space<vmem>>, %arg3: memref<1x256xf32, #tpu.memory_space<vmem>>, %arg4: memref<256x128xbf16, #tpu.memory_space<vmem>>, %arg5: memref<1x128xf32, #tpu.memory_space<vmem>>, %arg6: memref<16x128xf32, #tpu.memory_space<vmem>>, %arg7: memref<16x128xf32, #tpu.memory_space<vmem>>) attributes {dimension_semantics = [#tpu.dimension_semantics<parallel>], iteration_bounds = array<i64: 2>, scalar_prefetch = 0 : i64, scratch_operands = 1 : i64, tpu.core_type = #tpu.core_type<tc>, window_params = [{transform_indices = @transform_0, window_bounds = array<i64: 16, 128>}, {pipeline_mode = #tpu.pipeline_mode<synchronous>, transform_indices = @transform_1, window_bounds = array<i64: 128, 256>}, {pipeline_mode = #tpu.pipeline_mode<synchronous>, transform_indices = @transform_2, window_bounds = array<i64: 1, 256>}, {pipeline_mode = #tpu.pipeline_mode<synchronous>, transform_indices = @transform_3, window_bounds = array<i64: 256, 128>}, {pipeline_mode = #tpu.pipeline_mode<synchronous>, transform_indices = @transform_4, window_bounds = array<i64: 1, 128>}, {transform_indices = @transform_5, window_bounds = array<i64: 16, 128>}]} {
    %c0 = arith.constant 0 : index
    %c0_0 = arith.constant 0 : index
    %0 = vector.load %arg1[%c0, %c0_0] : memref<16x128xf32, #tpu.memory_space<vmem>>, vector<16x128xf32>
    %1 = arith.truncf %0 : vector<16x128xf32> to vector<16x128xbf16>
    %cst = arith.constant 0.000000e+00 : f32
    %2 = vector.broadcast %cst : f32 to vector<16x128xf32>
    %c0_1 = arith.constant 0 : index
    %c0_2 = arith.constant 0 : index
    %3 = vector.load %arg7[%c0_1, %c0_2] : memref<16x128xf32, #tpu.memory_space<vmem>>, vector<16x128xf32>
    tpu.vector_store %arg7[%c0_1, %c0_2], %2 {strides = array<i32>} : memref<16x128xf32, #tpu.memory_space<vmem>>, vector<16x128xf32>,
    %c0_3 = arith.constant 0 : index
    %c0_4 = arith.constant 0 : index
    %4 = vector.load %arg2[%c0_3, %c0_4] : memref<128x256xbf16, #tpu.memory_space<vmem>>, vector<128x128xbf16>
    %cst_5 = arith.constant dense<0.000000e+00> : vector<16x128xf32>
    %5 = tpu.matmul %1, %4, %cst_5 {dimension_numbers = #tpu.dot_dimension_numbers<[1], [0], [0], [1], [0, 0, 1, 1], [], []>} : vector<16x128xbf16>, vector<128x128xbf16>, vector<16x128xf32> -> vector<16x128xf32>
    %c0_6 = arith.constant 0 : index
    %c0_7 = arith.constant 0 : index
    %6 = vector.load %arg3[%c0_6, %c0_7] : memref<1x256xf32, #tpu.memory_space<vmem>>, vector<1x128xf32>
    %7 = vector.broadcast %6 : vector<1x128xf32> to vector<16x128xf32>
    %8 = arith.addf %5, %7 : vector<16x128xf32>
    %cst_8 = arith.constant 0.000000e+00 : f32
    %9 = vector.broadcast %cst_8 : f32 to vector<16x128xf32>
    %10 = arith.maximumf %8, %9 : vector<16x128xf32>
    %c0_9 = arith.constant 0 : index
    %c0_10 = arith.constant 0 : index
    %11 = vector.load %arg7[%c0_9, %c0_10] : memref<16x128xf32, #tpu.memory_space<vmem>>, vector<16x128xf32>
    %12 = arith.truncf %10 : vector<16x128xf32> to vector<16x128xbf16>
    %c0_11 = arith.constant 0 : index
    %c0_12 = arith.constant 0 : index
    %13 = vector.load %arg4[%c0_11, %c0_12] : memref<256x128xbf16, #tpu.memory_space<vmem>>, vector<128x128xbf16>
    %cst_13 = arith.constant dense<0.000000e+00> : vector<16x128xf32>
    %14 = tpu.matmul %12, %13, %cst_13 {dimension_numbers = #tpu.dot_dimension_numbers<[1], [0], [0], [1], [0, 0, 1, 1], [], []>} : vector<16x128xbf16>, vector<128x128xbf16>, vector<16x128xf32> -> vector<16x128xf32>
    %15 = arith.addf %11, %14 : vector<16x128xf32>
    %c0_14 = arith.constant 0 : index
    %c0_15 = arith.constant 0 : index
    %16 = vector.load %arg7[%c0_14, %c0_15] : memref<16x128xf32, #tpu.memory_space<vmem>>, vector<16x128xf32>
    tpu.vector_store %arg7[%c0_14, %c0_15], %15 {strides = array<i32>} : memref<16x128xf32, #tpu.memory_space<vmem>>, vector<16x128xf32>,
    %c0_16 = arith.constant 0 : index
    %c128 = arith.constant 128 : index
    %17 = vector.load %arg2[%c0_16, %c128] : memref<128x256xbf16, #tpu.memory_space<vmem>>, vector<128x128xbf16>
    %cst_17 = arith.constant dense<0.000000e+00> : vector<16x128xf32>
    %18 = tpu.matmul %1, %17, %cst_17 {dimension_numbers = #tpu.dot_dimension_numbers<[1], [0], [0], [1], [0, 0, 1, 1], [], []>} : vector<16x128xbf16>, vector<128x128xbf16>, vector<16x128xf32> -> vector<16x128xf32>
    %c0_18 = arith.constant 0 : index
    %c128_19 = arith.constant 128 : index
    %19 = vector.load %arg3[%c0_18, %c128_19] : memref<1x256xf32, #tpu.memory_space<vmem>>, vector<1x128xf32>
    %20 = vector.broadcast %19 : vector<1x128xf32> to vector<16x128xf32>
    %21 = arith.addf %18, %20 : vector<16x128xf32>
    %cst_20 = arith.constant 0.000000e+00 : f32
    %22 = vector.broadcast %cst_20 : f32 to vector<16x128xf32>
    %23 = arith.maximumf %21, %22 : vector<16x128xf32>
    %c0_21 = arith.constant 0 : index
    %c0_22 = arith.constant 0 : index
    %24 = vector.load %arg7[%c0_21, %c0_22] : memref<16x128xf32, #tpu.memory_space<vmem>>, vector<16x128xf32>
    %25 = arith.truncf %23 : vector<16x128xf32> to vector<16x128xbf16>
    %c128_23 = arith.constant 128 : index
    %c0_24 = arith.constant 0 : index
    %26 = vector.load %arg4[%c128_23, %c0_24] : memref<256x128xbf16, #tpu.memory_space<vmem>>, vector<128x128xbf16>
    %cst_25 = arith.constant dense<0.000000e+00> : vector<16x128xf32>
    %27 = tpu.matmul %25, %26, %cst_25 {dimension_numbers = #tpu.dot_dimension_numbers<[1], [0], [0], [1], [0, 0, 1, 1], [], []>} : vector<16x128xbf16>, vector<128x128xbf16>, vector<16x128xf32> -> vector<16x128xf32>
    %28 = arith.addf %24, %27 : vector<16x128xf32>
    %c0_26 = arith.constant 0 : index
    %c0_27 = arith.constant 0 : index
    %29 = vector.load %arg7[%c0_26, %c0_27] : memref<16x128xf32, #tpu.memory_space<vmem>>, vector<16x128xf32>
    tpu.vector_store %arg7[%c0_26, %c0_27], %28 {strides = array<i32>} : memref<16x128xf32, #tpu.memory_space<vmem>>, vector<16x128xf32>,
    %c0_28 = arith.constant 0 : index
    %c0_29 = arith.constant 0 : index
    %30 = vector.load %arg7[%c0_28, %c0_29] : memref<16x128xf32, #tpu.memory_space<vmem>>, vector<16x128xf32>
    %c0_30 = arith.constant 0 : index
    %c0_31 = arith.constant 0 : index
    %31 = vector.load %arg5[%c0_30, %c0_31] : memref<1x128xf32, #tpu.memory_space<vmem>>, vector<1x128xf32>
    %32 = vector.broadcast %31 : vector<1x128xf32> to vector<16x128xf32>
    %33 = arith.addf %30, %32 : vector<16x128xf32>
    %34 = arith.addf %33, %0 : vector<16x128xf32>
    %c0_32 = arith.constant 0 : index
    %c0_33 = arith.constant 0 : index
    %35 = vector.load %arg6[%c0_32, %c0_33] : memref<16x128xf32, #tpu.memory_space<vmem>>, vector<16x128xf32>
    tpu.vector_store %arg6[%c0_32, %c0_33], %34 {strides = array<i32>} : memref<16x128xf32, #tpu.memory_space<vmem>>, vector<16x128xf32>,
    return
  }
  func.func @transform_0(%arg0: i32) -> (i32, i32) {
    %c0_i32 = arith.constant 0 : i32
    %c0_i32_0 = arith.constant 0 : i32
    return %arg0, %c0_i32 : i32, i32
  }
  func.func @transform_1(%arg0: i32) -> (i32, i32) {
    %c0_i32 = arith.constant 0 : i32
    %c0_i32_0 = arith.constant 0 : i32
    %c0_i32_1 = arith.constant 0 : i32
    return %c0_i32, %c0_i32_0 : i32, i32
  }
  func.func @transform_2(%arg0: i32) -> (i32, i32) {
    %c0_i32 = arith.constant 0 : i32
    %c0_i32_0 = arith.constant 0 : i32
    %c0_i32_1 = arith.constant 0 : i32
    return %c0_i32, %c0_i32_0 : i32, i32
  }
  func.func @transform_3(%arg0: i32) -> (i32, i32) {
    %c0_i32 = arith.constant 0 : i32
    %c0_i32_0 = arith.constant 0 : i32
    %c0_i32_1 = arith.constant 0 : i32
    return %c0_i32, %c0_i32_0 : i32, i32
  }
  func.func @transform_4(%arg0: i32) -> (i32, i32) {
    %c0_i32 = arith.constant 0 : i32
    %c0_i32_0 = arith.constant 0 : i32
    %c0_i32_1 = arith.constant 0 : i32
    return %c0_i32, %c0_i32_0 : i32, i32
  }
  func.func @transform_5(%arg0: i32) -> (i32, i32) {
    %c0_i32 = arith.constant 0 : i32
    %c0_i32_0 = arith.constant 0 : i32
    return %arg0, %c0_i32 : i32, i32
  }
}

module attributes {stable_mosaic.version = 11 : i64} {
  func.func @ffn_bn_resident_kernel(%arg0: i32, %arg1: memref<16x128xf32, #tpu.memory_space<vmem>>, %arg2: memref<128x256xbf16, #tpu.memory_space<vmem>>, %arg3: memref<1x256xf32, #tpu.memory_space<vmem>>, %arg4: memref<256x128xbf16, #tpu.memory_space<vmem>>, %arg5: memref<1x128xf32, #tpu.memory_space<vmem>>, %arg6: memref<16x128xf32, #tpu.memory_space<vmem>>, %arg7: memref<16x128xf32, #tpu.memory_space<vmem>>) attributes {dimension_semantics = [#tpu.dimension_semantics<parallel>], iteration_bounds = array<i64: 2>, scalar_prefetch = 0 : i64, scratch_operands = 1 : i64, tpu.core_type = #tpu.core_type<tc>, window_params = [{transform_indices = @transform_0, window_bounds = array<i64: 16, 128>}, {pipeline_mode = #tpu.pipeline_mode<synchronous>, transform_indices = @transform_1, window_bounds = array<i64: 128, 256>}, {pipeline_mode = #tpu.pipeline_mode<synchronous>, transform_indices = @transform_2, window_bounds = array<i64: 1, 256>}, {pipeline_mode = #tpu.pipeline_mode<synchronous>, transform_indices = @transform_3, window_bounds = array<i64: 256, 128>}, {pipeline_mode = #tpu.pipeline_mode<synchronous>, transform_indices = @transform_4, window_bounds = array<i64: 1, 128>}, {transform_indices = @transform_5, window_bounds = array<i64: 16, 128>}]} {
    %c0 = arith.constant 0 : index
    %c0_0 = arith.constant 0 : index
    %0 = vector.load %arg1[%c0, %c0_0] : memref<16x128xf32, #tpu.memory_space<vmem>>, vector<16x128xf32>
    %1 = arith.truncf %0 : vector<16x128xf32> to vector<16x128xbf16>
    %cst = arith.constant 0.000000e+00 : f32
    %2 = vector.broadcast %cst : f32 to vector<16x128xf32>
    %c0_1 = arith.constant 0 : index
    %c0_2 = arith.constant 0 : index
    %3 = vector.load %arg7[%c0_1, %c0_2] : memref<16x128xf32, #tpu.memory_space<vmem>>, vector<16x128xf32>
    tpu.vector_store %arg7[%c0_1, %c0_2], %2 {strides = array<i32>} : memref<16x128xf32, #tpu.memory_space<vmem>>, vector<16x128xf32>,
    %c0_3 = arith.constant 0 : index
    %c0_4 = arith.constant 0 : index
    %4 = vector.load %arg2[%c0_3, %c0_4] : memref<128x256xbf16, #tpu.memory_space<vmem>>, vector<128x128xbf16>
    %cst_5 = arith.constant dense<0.000000e+00> : vector<16x128xf32>
    %5 = tpu.matmul %1, %4, %cst_5 {dimension_numbers = #tpu.dot_dimension_numbers<[1], [0], [0], [1], [0, 0, 1, 1], [], []>} : vector<16x128xbf16>, vector<128x128xbf16>, vector<16x128xf32> -> vector<16x128xf32>
    %c0_6 = arith.constant 0 : index
    %c0_7 = arith.constant 0 : index
    %6 = vector.load %arg3[%c0_6, %c0_7] : memref<1x256xf32, #tpu.memory_space<vmem>>, vector<1x128xf32>
    %7 = vector.broadcast %6 : vector<1x128xf32> to vector<16x128xf32>
    %8 = arith.addf %5, %7 : vector<16x128xf32>
    %cst_8 = arith.constant 0.000000e+00 : f32
    %9 = vector.broadcast %cst_8 : f32 to vector<16x128xf32>
    %10 = arith.maximumf %8, %9 : vector<16x128xf32>
    %c0_9 = arith.constant 0 : index
    %c0_10 = arith.constant 0 : index
    %11 = vector.load %arg7[%c0_9, %c0_10] : memref<16x128xf32, #tpu.memory_space<vmem>>, vector<16x128xf32>
    %12 = arith.truncf %10 : vector<16x128xf32> to vector<16x128xbf16>
    %c0_11 = arith.constant 0 : index
    %c0_12 = arith.constant 0 : index
    %13 = vector.load %arg4[%c0_11, %c0_12] : memref<256x128xbf16, #tpu.memory_space<vmem>>, vector<128x128xbf16>
    %cst_13 = arith.constant dense<0.000000e+00> : vector<16x128xf32>
    %14 = tpu.matmul %12, %13, %cst_13 {dimension_numbers = #tpu.dot_dimension_numbers<[1], [0], [0], [1], [0, 0, 1, 1], [], []>} : vector<16x128xbf16>, vector<128x128xbf16>, vector<16x128xf32> -> vector<16x128xf32>
    %15 = arith.addf %11, %14 : vector<16x128xf32>
    %c0_14 = arith.constant 0 : index
    %c0_15 = arith.constant 0 : index
    %16 = vector.load %arg7[%c0_14, %c0_15] : memref<16x128xf32, #tpu.memory_space<vmem>>, vector<16x128xf32>
    tpu.vector_store %arg7[%c0_14, %c0_15], %15 {strides = array<i32>} : memref<16x128xf32, #tpu.memory_space<vmem>>, vector<16x128xf32>,
    %c0_16 = arith.constant 0 : index
    %c128 = arith.constant 128 : index
    %17 = vector.load %arg2[%c0_16, %c128] : memref<128x256xbf16, #tpu.memory_space<vmem>>, vector<128x128xbf16>
    %cst_17 = arith.constant dense<0.000000e+00> : vector<16x128xf32>
    %18 = tpu.matmul %1, %17, %cst_17 {dimension_numbers = #tpu.dot_dimension_numbers<[1], [0], [0], [1], [0, 0, 1, 1], [], []>} : vector<16x128xbf16>, vector<128x128xbf16>, vector<16x128xf32> -> vector<16x128xf32>
    %c0_18 = arith.constant 0 : index
    %c128_19 = arith.constant 128 : index
    %19 = vector.load %arg3[%c0_18, %c128_19] : memref<1x256xf32, #tpu.memory_space<vmem>>, vector<1x128xf32>
    %20 = vector.broadcast %19 : vector<1x128xf32> to vector<16x128xf32>
    %21 = arith.addf %18, %20 : vector<16x128xf32>
    %cst_20 = arith.constant 0.000000e+00 : f32
    %22 = vector.broadcast %cst_20 : f32 to vector<16x128xf32>
    %23 = arith.maximumf %21, %22 : vector<16x128xf32>
    %c0_21 = arith.constant 0 : index
    %c0_22 = arith.constant 0 : index
    %24 = vector.load %arg7[%c0_21, %c0_22] : memref<16x128xf32, #tpu.memory_space<vmem>>, vector<16x128xf32>
    %25 = arith.truncf %23 : vector<16x128xf32> to vector<16x128xbf16>
    %c128_23 = arith.constant 128 : index
    %c0_24 = arith.constant 0 : index
    %26 = vector.load %arg4[%c128_23, %c0_24] : memref<256x128xbf16, #tpu.memory_space<vmem>>, vector<128x128xbf16>
    %cst_25 = arith.constant dense<0.000000e+00> : vector<16x128xf32>
    %27 = tpu.matmul %25, %26, %cst_25 {dimension_numbers = #tpu.dot_dimension_numbers<[1], [0], [0], [1], [0, 0, 1, 1], [], []>} : vector<16x128xbf16>, vector<128x128xbf16>, vector<16x128xf32> -> vector<16x128xf32>
    %28 = arith.addf %24, %27 : vector<16x128xf32>
    %c0_26 = arith.constant 0 : index
    %c0_27 = arith.constant 0 : index
    %29 = vector.load %arg7[%c0_26, %c0_27] : memref<16x128xf32, #tpu.memory_space<vmem>>, vector<16x128xf32>
    tpu.vector_store %arg7[%c0_26, %c0_27], %28 {strides = array<i32>} : memref<16x128xf32, #tpu.memory_space<vmem>>, vector<16x128xf32>,
    %c0_28 = arith.constant 0 : index
    %c0_29 = arith.constant 0 : index
    %30 = vector.load %arg7[%c0_28, %c0_29] : memref<16x128xf32, #tpu.memory_space<vmem>>, vector<16x128xf32>
    %c0_30 = arith.constant 0 : index
    %c0_31 = arith.constant 0 : index
    %31 = vector.load %arg5[%c0_30, %c0_31] : memref<1x128xf32, #tpu.memory_space<vmem>>, vector<1x128xf32>
    %32 = vector.broadcast %31 : vector<1x128xf32> to vector<16x128xf32>
    %33 = arith.addf %30, %32 : vector<16x128xf32>
    %34 = arith.addf %33, %0 : vector<16x128xf32>
    %c0_32 = arith.constant 0 : index
    %c0_33 = arith.constant 0 : index
    %35 = vector.load %arg6[%c0_32, %c0_33] : memref<16x128xf32, #tpu.memory_space<vmem>>, vector<16x128xf32>
    tpu.vector_store %arg6[%c0_32, %c0_33], %34 {strides = array<i32>} : memref<16x128xf32, #tpu.memory_space<vmem>>, vector<16x128xf32>,
    return
  }
  func.func @transform_0(%arg0: i32) -> (i32, i32) {
    %c0_i32 = arith.constant 0 : i32
    %c0_i32_0 = arith.constant 0 : i32
    return %arg0, %c0_i32 : i32, i32
  }
  func.func @transform_1(%arg0: i32) -> (i32, i32) {
    %c0_i32 = arith.constant 0 : i32
    %c0_i32_0 = arith.constant 0 : i32
    %c0_i32_1 = arith.constant 0 : i32
    return %c0_i32, %c0_i32_0 : i32, i32
  }
  func.func @transform_2(%arg0: i32) -> (i32, i32) {
    %c0_i32 = arith.constant 0 : i32
    %c0_i32_0 = arith.constant 0 : i32
    %c0_i32_1 = arith.constant 0 : i32
    return %c0_i32, %c0_i32_0 : i32, i32
  }
  func.func @transform_3(%arg0: i32) -> (i32, i32) {
    %c0_i32 = arith.constant 0 : i32
    %c0_i32_0 = arith.constant 0 : i32
    %c0_i32_1 = arith.constant 0 : i32
    return %c0_i32, %c0_i32_0 : i32, i32
  }
  func.func @transform_4(%arg0: i32) -> (i32, i32) {
    %c0_i32 = arith.constant 0 : i32
    %c0_i32_0 = arith.constant 0 : i32
    %c0_i32_1 = arith.constant 0 : i32
    return %c0_i32, %c0_i32_0 : i32, i32
  }
  func.func @transform_5(%arg0: i32) -> (i32, i32) {
    %c0_i32 = arith.constant 0 : i32
    %c0_i32_0 = arith.constant 0 : i32
    return %arg0, %c0_i32 : i32, i32
  }
}

</mosaic_0001>

<llo_original>
// kernel: tpu_custom_call.1
$region0: #{tpu_custom_call.1}
  #allocation0 [shape = 'u32[]', space=smem, size = 0x4, offset = 0x4, fixed_abs, tag = 'smem constant byte address 0x4 - core index']
  #allocation1 [shape = 'u32[144,128]{1,0:T(1,128)}', space=vmem, size = 0x12000, scoped, tag = 'internal scratch']
  #allocation2 [shape = 'f32[16,128]{1,0:T(8,128)}', space=vmem, size = 0x2000, scoped, tag = 'scratch operand']
  %s0 = inlined_call_operand.hbm [shape: f32[32,128], index: 0, kind: input, shape index: {}]
  %s1 = inlined_call_operand.hbm [shape: bf16[128,256], index: 1, kind: input, shape index: {}]
  %s2 = inlined_call_operand.vmem [shape: f32[1,256], index: 2, kind: input, shape index: {}]
  %s3 = inlined_call_operand.hbm [shape: bf16[256,128], index: 3, kind: input, shape index: {}]
  %s4 = inlined_call_operand.vmem [shape: f32[1,128], index: 4, kind: input, shape index: {}]
  %s5 = inlined_call_operand.hbm [shape: f32[32,128], index: 5, kind: output, shape index: {}]
  %s6 = sld [smem:[#allocation0]]
  $region65: #{tpu_custom_call.1} parent=0
    _
  %s8 = ssub.s32 1, %s6
  %s9 = scalar_select 0, %s8, %s6
  $region1: #{tpu_custom_call.1} parent=0
    #allocation3 [shape = 'u8[16384]{0}', space=vmem, size = 0x4000, scoped, tag = 'input window, operand 0']
    #allocation4 [shape = 's32[2]{0}', space=sflag, size = 0x8, scoped, tag = 'scoped memory for tpu_custom_call.1']
    #allocation5 [shape = 's32[2]{0}', space=sflag, size = 0x8, scoped, tag = 'scoped memory for tpu_custom_call.1']
    #allocation6 [shape = 'u8[65536]{0}', space=vmem, size = 0x10000, scoped, tag = 'input window, operand 1, single buffered']
    #allocation7 [shape = 's32[1]{0}', space=sflag, size = 0x4, scoped, tag = 'scoped memory for tpu_custom_call.1']
    #allocation8 [shape = 'u8[65536]{0}', space=vmem, size = 0x10000, scoped, tag = 'input window, operand 3, single buffered']
    #allocation9 [shape = 'u8[16384]{0}', space=vmem, size = 0x4000, scoped, tag = 'output window, operand 0']
    %10 = vsyncpa [#allocation4], 0
    %s11 = scalar_lea.sflag [#allocation4], 1
    %12 = vsyncpa %s11, 0
    %13 = vsyncpa [#allocation7], 0
    %14 = vsyncpa [#allocation5], 0
    %s15 = scalar_lea.sflag [#allocation5], 1
    %16 = vsyncpa %s15, 0
    loop: start=0, step=1, limit=4
    $region2: #{tpu_custom_call.1} parent=1 // loop_pre_header
      _
    $region3: #{tpu_custom_call.1} parent=1 // loop_header
      %s18 = sphi 0, %s22
      %p19 = scmp.ge.s32.totalorder %s18, 4
      %s28 = sphi 0, %s30
      %s31 = sphi 0, %s28
      %s32 = sphi 0, %s31
      %s48 = sphi 0, %s32
      %s52 = sphi 0, %s52
      %s54 = sphi 0, %s52
      %s55 = sphi 0, %s54
      %s69 = sphi 0, %s55
      %s73 = sphi 0, %s73
      %s75 = sphi 0, %s73
      %s76 = sphi 0, %s75
      %s90 = sphi 0, %s76
      %s94 = sphi 0, %s94
      %s96 = sphi 0, %s94
      %s97 = sphi 0, %s96
      %s111 = sphi 0, %s97
      %s115 = sphi 0, %s115
      %s117 = sphi 0, %s115
      %s118 = sphi 0, %s117
      %s132 = sphi 0, %s118
      %s138 = sphi 0, %s140
      %s141 = sphi 0, %s138
      %s142 = sphi 0, %s141
      %s158 = sphi 0, %s142
    $region4: #{tpu_custom_call.1} parent=1 // loop_header_branch
      %21 = sbr.rel (%p19) target = $region8
    $region5: #{tpu_custom_call.1} parent=1 // loop_body
      %s23 = ssub.s32 %s18, 1
      %s24 = ssub.s32 %s18, 2
      %s25 = sadd.s32 %s18, 1
      %s26 = ssub.s32 %s18, %s25
      %p27 = scmp.eq.s32.totalorder %s26, 0
      %s29 = sadd.s32 %s28, 1
      %s30 = scalar_select %p27, %s28, %s29
      %p33 = pneg %p27
      %p34 = scmp.eq.s32.totalorder %s18, 1
      %p35 = por %p33, %p34
      %p36 = scmp.ne.s32.totalorder %s28, %s31
      %p37 = scmp.eq.s32.totalorder %s18, 0
      %p38 = por %p36, %p37
      %p39 = scmp.ne.s32.totalorder %s28, %s31
      %p40 = scmp.eq.s32.totalorder %s23, 1
      %p41 = por %p39, %p40
      %p42 = scmp.ne.s32.totalorder %s31, %s32
      %p43 = scmp.eq.s32.totalorder %s23, 0
      %p44 = por %p42, %p43
      %p45 = scmp.ne.s32.totalorder %s31, %s32
      %p46 = scmp.eq.s32.totalorder %s24, 1
      %p47 = por %p45, %p46
      %p49 = scmp.ne.s32.totalorder %s32, %s48
      %p50 = scmp.eq.s32.totalorder %s24, 0
      %p51 = por %p49, %p50
      %s53 = sadd.s32 %s52, 1
      %p56 = scmp.eq.s32.totalorder %s18, 1
      %p57 = scmp.ne.s32.totalorder %s52, %s54
      %p58 = scmp.eq.s32.totalorder %s18, 0
      %p59 = por %p57, %p58
      %p60 = scmp.ne.s32.totalorder %s52, %s54
      %p61 = scmp.eq.s32.totalorder %s23, 1
      %p62 = por %p60, %p61
      %p63 = scmp.ne.s32.totalorder %s54, %s55
      %p64 = scmp.eq.s32.totalorder %s23, 0
      %p65 = por %p63, %p64
      %p66 = scmp.ne.s32.totalorder %s54, %s55
      %p67 = scmp.eq.s32.totalorder %s24, 1
      %p68 = por %p66, %p67
      %p70 = scmp.ne.s32.totalorder %s55, %s69
      %p71 = scmp.eq.s32.totalorder %s24, 0
      %p72 = por %p70, %p71
      %s74 = sadd.s32 %s73, 1
      %p77 = scmp.eq.s32.totalorder %s18, 1
      %p78 = scmp.ne.s32.totalorder %s73, %s75
      %p79 = scmp.eq.s32.totalorder %s18, 0
      %p80 = por %p78, %p79
      %p81 = scmp.ne.s32.totalorder %s73, %s75
      %p82 = scmp.eq.s32.totalorder %s23, 1
      %p83 = por %p81, %p82
      %p84 = scmp.ne.s32.totalorder %s75, %s76
      %p85 = scmp.eq.s32.totalorder %s23, 0
      %p86 = por %p84, %p85
      %p87 = scmp.ne.s32.totalorder %s75, %s76
      %p88 = scmp.eq.s32.totalorder %s24, 1
      %p89 = por %p87, %p88
      %p91 = scmp.ne.s32.totalorder %s76, %s90
      %p92 = scmp.eq.s32.totalorder %s24, 0
      %p93 = por %p91, %p92
      %s95 = sadd.s32 %s94, 1
      %p98 = scmp.eq.s32.totalorder %s18, 1
      %p99 = scmp.ne.s32.totalorder %s94, %s96
      %p100 = scmp.eq.s32.totalorder %s18, 0
      %p101 = por %p99, %p100
      %p102 = scmp.ne.s32.totalorder %s94, %s96
      %p103 = scmp.eq.s32.totalorder %s23, 1
      %p104 = por %p102, %p103
      %p105 = scmp.ne.s32.totalorder %s96, %s97
      %p106 = scmp.eq.s32.totalorder %s23, 0
      %p107 = por %p105, %p106
      %p108 = scmp.ne.s32.totalorder %s96, %s97
      %p109 = scmp.eq.s32.totalorder %s24, 1
      %p110 = por %p108, %p109
      %p112 = scmp.ne.s32.totalorder %s97, %s111
      %p113 = scmp.eq.s32.totalorder %s24, 0
      %p114 = por %p112, %p113
      %s116 = sadd.s32 %s115, 1
      %p119 = scmp.eq.s32.totalorder %s18, 1
      %p120 = scmp.ne.s32.totalorder %s115, %s117
      %p121 = scmp.eq.s32.totalorder %s18, 0
      %p122 = por %p120, %p121
      %p123 = scmp.ne.s32.totalorder %s115, %s117
      %p124 = scmp.eq.s32.totalorder %s23, 1
      %p125 = por %p123, %p124
      %p126 = scmp.ne.s32.totalorder %s117, %s118
      %p127 = scmp.eq.s32.totalorder %s23, 0
      %p128 = por %p126, %p127
      %p129 = scmp.ne.s32.totalorder %s117, %s118
      %p130 = scmp.eq.s32.totalorder %s24, 1
      %p131 = por %p129, %p130
      %p133 = scmp.ne.s32.totalorder %s118, %s132
      %p134 = scmp.eq.s32.totalorder %s24, 0
      %p135 = por %p133, %p134
      %s136 = ssub.s32 %s18, %s25
      %p137 = scmp.eq.s32.totalorder %s136, 0
      %s139 = sadd.s32 %s138, 1
      %s140 = scalar_select %p137, %s138, %s139
      %p143 = pneg %p137
      %p144 = scmp.eq.s32.totalorder %s18, 1
      %p145 = por %p143, %p144
      %p146 = scmp.ne.s32.totalorder %s138, %s141
      %p147 = scmp.eq.s32.totalorder %s18, 0
      %p148 = por %p146, %p147
      %p149 = scmp.ne.s32.totalorder %s138, %s141
      %p150 = scmp.eq.s32.totalorder %s23, 1
      %p151 = por %p149, %p150
      %p152 = scmp.ne.s32.totalorder %s141, %s142
      %p153 = scmp.eq.s32.totalorder %s23, 0
      %p154 = por %p152, %p153
      %p155 = scmp.ne.s32.totalorder %s141, %s142
      %p156 = scmp.eq.s32.totalorder %s24, 1
      %p157 = por %p155, %p156
      %p159 = scmp.ne.s32.totalorder %s142, %s158
      %p160 = scmp.eq.s32.totalorder %s24, 0
      %p161 = por %p159, %p160
      %p162 = scmp.le.s32.totalorder 1, %s18
      %p163 = scmp.lt.s32.totalorder %s18, 3
      %p164 = pnand %p162, %p163
      %p165 = pneg %p164
      // Predicated region
      $region9: #{tpu_custom_call.1} parent=5 // pred_check
        _
      $region10: #{tpu_custom_call.1} parent=5 // pred_check_branch
        %167 = sbr.rel (%p164) target = $region12
      $region11: #{tpu_custom_call.1} parent=5 // pred_region
        %s168 = ssub.s32 %s18, 1
        // Predicated region
        $region13: #{tpu_custom_call.1} parent=11 // pred_check
          %p169 = pneg %p65
        $region14: #{tpu_custom_call.1} parent=11 // pred_check_branch
          %171 = sbr.rel (%p169) target = $region16
        $region15: #{tpu_custom_call.1} parent=11 // pred_region
          %s173 = ssub.s32 2048, 2048
          %174 = vsyncadd [#allocation7], %s173
          %s175 = sshll.u32 [#allocation6], 4
          %s176 = int_to_ptr.vmem [resolvable:$true] %s175
          %181 = dma.hbm_to_vmem [thread:$0]  %s1, 2048, %s176, [#allocation7], 128, 128, 8
        $region16: #{tpu_custom_call.1} parent=11 // pred_fallthru
          _
        // Predicated region
        $region17: #{tpu_custom_call.1} parent=11 // pred_check
          %p182 = pneg %p86
        $region18: #{tpu_custom_call.1} parent=11 // pred_check_branch
          %184 = sbr.rel (%p182) target = $region20
        $region19: #{tpu_custom_call.1} parent=11 // pred_region
          _
        $region20: #{tpu_custom_call.1} parent=11 // pred_fallthru
          _
        // Predicated region
        $region21: #{tpu_custom_call.1} parent=11 // pred_check
          %p185 = pneg %p107
        $region22: #{tpu_custom_call.1} parent=11 // pred_check_branch
          %187 = sbr.rel (%p185) target = $region24
        $region23: #{tpu_custom_call.1} parent=11 // pred_region
          %s189 = ssub.s32 2048, 2048
          %190 = vsyncadd [#allocation7], %s189
          %s191 = sshll.u32 [#allocation8], 4
          %s192 = int_to_ptr.vmem [resolvable:$true] %s191
          %197 = dma.hbm_to_vmem [thread:$0]  %s3, 2048, %s192, [#allocation7], 64, 64, 4
        $region24: #{tpu_custom_call.1} parent=11 // pred_fallthru
          _
        // Predicated region
        $region25: #{tpu_custom_call.1} parent=11 // pred_check
          %p198 = pneg %p128
        $region26: #{tpu_custom_call.1} parent=11 // pred_check_branch
          %200 = sbr.rel (%p198) target = $region28
        $region27: #{tpu_custom_call.1} parent=11 // pred_region
          _
        $region28: #{tpu_custom_call.1} parent=11 // pred_fallthru
          _
      $region12: #{tpu_custom_call.1} parent=5 // pred_fallthru
        _
      %p201 = scmp.lt.s32.totalorder %s18, 2
      // Predicated region
      $region29: #{tpu_custom_call.1} parent=5 // pred_check
        %p202 = pneg %p201
      $region30: #{tpu_custom_call.1} parent=5 // pred_check_branch
        %204 = sbr.rel (%p202) target = $region32
      $region31: #{tpu_custom_call.1} parent=5 // pred_region
        // Predicated region
        $region33: #{tpu_custom_call.1} parent=31 // pred_check
          %p205 = pneg %p38
        $region34: #{tpu_custom_call.1} parent=31 // pred_check_branch
          %207 = sbr.rel (%p205) target = $region36
        $region35: #{tpu_custom_call.1} parent=31 // pred_region
          %s208 = sand.u32 %s28, 1
          %s209 = scalar_lea.sflag [#allocation4], %s208
          %s210 = sand.u32 %s28, 1
          %s211 = smul.addr %s210, 16
          %s212 = scalar_lea.vmem [#allocation3], %s211
          %s213 = smul.u32 2, %s18
          %s215 = ssub.s32 256, 256
          %216 = vsyncadd %s209, %s215
          %s217 = smul.addr %s213, 128
          %s218 = scalar_lea.hbm %s0, %s217
          %s219 = sshll.u32 %s212, 4
          %s220 = int_to_ptr.vmem [resolvable:$true] %s219
          %225 = dma.hbm_to_vmem [thread:$0]  %s218, 256, %s220, %s209, 128, 128, 8
        $region36: #{tpu_custom_call.1} parent=31 // pred_fallthru
          _
      $region32: #{tpu_custom_call.1} parent=5 // pred_fallthru
        _
      %p226 = scmp.le.s32.totalorder 1, %s18
      %p227 = scmp.lt.s32.totalorder %s18, 3
      %p228 = pnand %p226, %p227
      %p229 = pneg %p228
      // Predicated region
      $region37: #{tpu_custom_call.1} parent=5 // pred_check
        _
      $region38: #{tpu_custom_call.1} parent=5 // pred_check_branch
        %231 = sbr.rel (%p228) target = $region40
      $region39: #{tpu_custom_call.1} parent=5 // pred_region
        %s232 = ssub.s32 %s18, 1
        %s233 = sand.u32 %s31, 1
        %s234 = scalar_lea.sflag [#allocation4], %s233
        %s235 = sand.u32 %s31, 1
        %s236 = smul.addr %s235, 16
        %s237 = scalar_lea.vmem [#allocation3], %s236
        // Predicated region
        $region41: #{tpu_custom_call.1} parent=39 // pred_check
          %p238 = pneg %p44
        $region42: #{tpu_custom_call.1} parent=39 // pred_check_branch
          %240 = sbr.rel (%p238) target = $region44
        $region43: #{tpu_custom_call.1} parent=39 // pred_region
          %241 = dma.done %s234, 256
        $region44: #{tpu_custom_call.1} parent=39 // pred_fallthru
          _
        // Predicated region
        $region45: #{tpu_custom_call.1} parent=39 // pred_check
          %p242 = pneg %p65
        $region46: #{tpu_custom_call.1} parent=39 // pred_check_branch
          %244 = sbr.rel (%p242) target = $region48
        $region47: #{tpu_custom_call.1} parent=39 // pred_region
          %245 = dma.done [#allocation7], 2048
        $region48: #{tpu_custom_call.1} parent=39 // pred_fallthru
          _
        // Predicated region
        $region49: #{tpu_custom_call.1} parent=39 // pred_check
          %p246 = pneg %p107
        $region50: #{tpu_custom_call.1} parent=39 // pred_check_branch
          %248 = sbr.rel (%p246) target = $region52
        $region51: #{tpu_custom_call.1} parent=39 // pred_region
          %249 = dma.done [#allocation7], 2048
        $region52: #{tpu_custom_call.1} parent=39 // pred_fallthru
          _
        %s250 = sand.u32 %s31, 1
        %s251 = scalar_lea.sflag [#allocation4], %s250
        %s252 = sand.u32 %s31, 1
        %s253 = smul.addr %s252, 16
        %s254 = scalar_lea.vmem [#allocation3], %s253
        %p255 = pneg %p44
        %p256 = pneg %p41
        %p257 = pneg %p65
        %p258 = pneg %p62
        %p259 = pneg %p86
        %p260 = pneg %p83
        %p261 = pneg %p107
        %p262 = pneg %p104
        %p263 = pneg %p128
        %p264 = pneg %p125
        %p265 = pneg %p154
        %p266 = pneg %p151
        %s267 = sand.u32 %s141, 1
        %s268 = scalar_lea.sflag [#allocation5], %s267
        %s269 = sand.u32 %s141, 1
        %s270 = smul.addr %s269, 16
        %s271 = scalar_lea.vmem [#allocation9], %s270
        %s272 = smul.u32 2, %s23
        %s273 = smul.u32 2, %s23
        %v275 = vld [vmem:[%s237] sm:$0xff]
        %v276 = vld [vmem:[%s237 + $0x8] sm:$0xff]
        %v277 = vpack.c.bf16 %v276, %v275
        %278 = vst [vmem:[#allocation2] sm:$0xff] 0.0
        %279 = vst [vmem:[#allocation2 + $0x8] sm:$0xff] 0.0
        %v280 = vld [vmem:[#allocation6] sm:$0xf]
        %v281 = vld [vmem:[#allocation6 + $0x8] sm:$0xf]
        %v282 = vld [vmem:[#allocation6 + $0x10] sm:$0xf]
        %v283 = vld [vmem:[#allocation6 + $0x18] sm:$0xf]
        %v284 = vld [vmem:[#allocation6 + $0x20] sm:$0xf]
        %v285 = vld [vmem:[#allocation6 + $0x28] sm:$0xf]
        %v286 = vld [vmem:[#allocation6 + $0x30] sm:$0xf]
        %v287 = vld [vmem:[#allocation6 + $0x38] sm:$0xf]
        %v288 = vld [vmem:[#allocation6 + $0x40] sm:$0xf]
        %v289 = vld [vmem:[#allocation6 + $0x48] sm:$0xf]
        %v290 = vld [vmem:[#allocation6 + $0x50] sm:$0xf]
        %v291 = vld [vmem:[#allocation6 + $0x58] sm:$0xf]
        %v292 = vld [vmem:[#allocation6 + $0x60] sm:$0xf]
        %v293 = vld [vmem:[#allocation6 + $0x68] sm:$0xf]
        %v294 = vld [vmem:[#allocation6 + $0x70] sm:$0xf]
        %v295 = vld [vmem:[#allocation6 + $0x78] sm:$0xf]
        %v296 = vld [vmem:[%s2] sm:$0x1]
        %v298 = vlaneseq
        %v299 = vshrl.u32 %v298, 7
        %v300 = vsub.s32 0, %v299
        %v301 = vrot.slane %v296, %v300
        %v319 = vunpack.c.l.b16 %v280
        %v320 = vunpack.c.l.b16 %v281
        %v321 = vunpack.c.l.b16 %v282
        %v322 = vunpack.c.l.b16 %v283
        %v323 = vunpack.c.l.b16 %v284
        %v324 = vunpack.c.l.b16 %v285
        %v325 = vunpack.c.l.b16 %v286
        %v326 = vunpack.c.l.b16 %v287
        %v327 = vunpack.c.l.b16 %v288
        %v328 = vunpack.c.l.b16 %v289
        %v329 = vunpack.c.l.b16 %v290
        %v330 = vunpack.c.l.b16 %v291
        %v331 = vunpack.c.l.b16 %v292
        %v332 = vunpack.c.l.b16 %v293
        %v333 = vunpack.c.l.b16 %v294
        %v334 = vunpack.c.l.b16 %v295
        %v335 = vpack.c.b16 %v320, %v319
        %v336 = vpack.c.b16 %v322, %v321
        %v337 = vpack.c.b16 %v324, %v323
        %v338 = vpack.c.b16 %v326, %v325
        %v339 = vpack.c.b16 %v328, %v327
        %v340 = vpack.c.b16 %v330, %v329
        %v341 = vpack.c.b16 %v332, %v331
        %v342 = vpack.c.b16 %v334, %v333
        %351 = vmatprep.subr.bf16.mxu0 0
        %352 = vmatpush1.bf16.msra.mxu0 %v335
        %353 = vmatprep.subr.bf16.mxu0 0
        %354 = vmatpush1.bf16.msra.mxu0 %v336
        %355 = vmatprep.subr.bf16.mxu0 0
        %356 = vmatpush1.bf16.msra.mxu0 %v337
        %357 = vmatprep.subr.bf16.mxu0 0
        %358 = vmatpush1.bf16.msra.mxu0 %v338
        %359 = vmatprep.subr.bf16.mxu0 0
        %360 = vmatpush1.bf16.msra.mxu0 %v339
        %361 = vmatprep.subr.bf16.mxu0 0
        %362 = vmatpush1.bf16.msra.mxu0 %v340
        %363 = vmatprep.subr.bf16.mxu0 0
        %364 = vmatpush1.bf16.msra.mxu0 %v341
        %365 = vmatprep.subr.bf16.mxu0 0
        %366 = vmatpush1.bf16.msra.mxu0 %v342
        %367 = vmatprep.subr.bf16.mxu0 0
        %368 = vmatpush1.bf16.msra.mxu0 0
        %369 = vmatprep.subr.bf16.mxu0 0
        %370 = vmatpush1.bf16.msra.mxu0 0
        %371 = vmatprep.subr.bf16.mxu0 0
        %372 = vmatpush1.bf16.msra.mxu0 0
        %373 = vmatprep.subr.bf16.mxu0 0
        %374 = vmatpush1.bf16.msra.mxu0 0
        %375 = vmatprep.subr.bf16.mxu0 0
        %376 = vmatpush1.bf16.msra.mxu0 0
        %377 = vmatprep.subr.bf16.mxu0 0
        %378 = vmatpush1.bf16.msra.mxu0 0
        %379 = vmatprep.subr.bf16.mxu0 0
        %380 = vmatpush1.bf16.msra.mxu0 0
        %381 = vmatprep.subr.bf16.mxu0 0
        %382 = vmatpush1.bf16.msra.mxu0 0
        %383 = vmatprep.mubr.bf16.mxu0 0
        %384 = vmatmul.mubr.bf16.gmra.mrb[0].mxu0 %v277
        %v385 = vpop.f32.mrb[0].mxu0
        %v386 = vadd.f32 %v301, %v385
        %v387 = vpop.f32.mrb[0].mxu0
        %v388 = vpop.f32.mrb[0].mxu0
        %v389 = vadd.f32 %v301, %v388
        %v390 = vpop.f32.mrb[0].mxu0
        %391 = vdwg.mxu0
        %v392 = vmax.f32 %v386, 0.0
        %v393 = vmax.f32 %v389, 0.0
        %v394 = vld [vmem:[#allocation2] sm:$0xff]
        %v395 = vld [vmem:[#allocation2 + $0x8] sm:$0xff]
        %v396 = vpack.c.bf16 %v393, %v392
        %v397 = vld [vmem:[#allocation8] sm:$0xf]
        %v398 = vld [vmem:[#allocation8 + $0x4] sm:$0xf]
        %v399 = vld [vmem:[#allocation8 + $0x8] sm:$0xf]
        %v400 = vld [vmem:[#allocation8 + $0xc] sm:$0xf]
        %v401 = vld [vmem:[#allocation8 + $0x10] sm:$0xf]
        %v402 = vld [vmem:[#allocation8 + $0x14] sm:$0xf]
        %v403 = vld [vmem:[#allocation8 + $0x18] sm:$0xf]
        %v404 = vld [vmem:[#allocation8 + $0x1c] sm:$0xf]
        %v405 = vld [vmem:[#allocation8 + $0x20] sm:$0xf]
        %v406 = vld [vmem:[#allocation8 + $0x24] sm:$0xf]
        %v407 = vld [vmem:[#allocation8 + $0x28] sm:$0xf]
        %v408 = vld [vmem:[#allocation8 + $0x2c] sm:$0xf]
        %v409 = vld [vmem:[#allocation8 + $0x30] sm:$0xf]
        %v410 = vld [vmem:[#allocation8 + $0x34] sm:$0xf]
        %v411 = vld [vmem:[#allocation8 + $0x38] sm:$0xf]
        %v412 = vld [vmem:[#allocation8 + $0x3c] sm:$0xf]
        %v429 = vunpack.c.l.b16 %v397
        %v430 = vunpack.c.l.b16 %v398
        %v431 = vunpack.c.l.b16 %v399
        %v432 = vunpack.c.l.b16 %v400
        %v433 = vunpack.c.l.b16 %v401
        %v434 = vunpack.c.l.b16 %v402
        %v435 = vunpack.c.l.b16 %v403
        %v436 = vunpack.c.l.b16 %v404
        %v437 = vunpack.c.l.b16 %v405
        %v438 = vunpack.c.l.b16 %v406
        %v439 = vunpack.c.l.b16 %v407
        %v440 = vunpack.c.l.b16 %v408
        %v441 = vunpack.c.l.b16 %v409
        %v442 = vunpack.c.l.b16 %v410
        %v443 = vunpack.c.l.b16 %v411
        %v444 = vunpack.c.l.b16 %v412
        %v445 = vpack.c.b16 %v430, %v429
        %v446 = vpack.c.b16 %v432, %v431
        %v447 = vpack.c.b16 %v434, %v433
        %v448 = vpack.c.b16 %v436, %v435
        %v449 = vpack.c.b16 %v438, %v437
        %v450 = vpack.c.b16 %v440, %v439
        %v451 = vpack.c.b16 %v442, %v441
        %v452 = vpack.c.b16 %v444, %v443
        %461 = vmatprep.subr.bf16.mxu0 0
        %462 = vmatpush1.bf16.msra.mxu0 %v445
        %463 = vmatprep.subr.bf16.mxu0 0
        %464 = vmatpush1.bf16.msra.mxu0 %v446
        %465 = vmatprep.subr.bf16.mxu0 0
        %466 = vmatpush1.bf16.msra.mxu0 %v447
        %467 = vmatprep.subr.bf16.mxu0 0
        %468 = vmatpush1.bf16.msra.mxu0 %v448
        %469 = vmatprep.subr.bf16.mxu0 0
        %470 = vmatpush1.bf16.msra.mxu0 %v449
        %471 = vmatprep.subr.bf16.mxu0 0
        %472 = vmatpush1.bf16.msra.mxu0 %v450
        %473 = vmatprep.subr.bf16.mxu0 0
        %474 = vmatpush1.bf16.msra.mxu0 %v451
        %475 = vmatprep.subr.bf16.mxu0 0
        %476 = vmatpush1.bf16.msra.mxu0 %v452
        %477 = vmatprep.subr.bf16.mxu0 0
        %478 = vmatpush1.bf16.msra.mxu0 0
        %479 = vmatprep.subr.bf16.mxu0 0
        %480 = vmatpush1.bf16.msra.mxu0 0
        %481 = vmatprep.subr.bf16.mxu0 0
        %482 = vmatpush1.bf16.msra.mxu0 0
        %483 = vmatprep.subr.bf16.mxu0 0
        %484 = vmatpush1.bf16.msra.mxu0 0
        %485 = vmatprep.subr.bf16.mxu0 0
        %486 = vmatpush1.bf16.msra.mxu0 0
        %487 = vmatprep.subr.bf16.mxu0 0
        %488 = vmatpush1.bf16.msra.mxu0 0
        %489 = vmatprep.subr.bf16.mxu0 0
        %490 = vmatpush1.bf16.msra.mxu0 0
        %491 = vmatprep.subr.bf16.mxu0 0
        %492 = vmatpush1.bf16.msra.mxu0 0
        %493 = vmatprep.mubr.bf16.mxu0 0
        %494 = vmatmul.mubr.bf16.gmra.mrb[0].mxu0 %v396
        %v495 = vpop.f32.mrb[0].mxu0
        %v496 = vadd.f32 0.0, %v495
        %v497 = vpop.f32.mrb[0].mxu0
        %v498 = vpop.f32.mrb[0].mxu0
        %v499 = vadd.f32 0.0, %v498
        %v500 = vpop.f32.mrb[0].mxu0
        %501 = vdwg.mxu0
        %v502 = vadd.f32 %v394, %v496
        %v503 = vadd.f32 %v395, %v499
        %504 = vst [vmem:[#allocation2] sm:$0xff] %v502
        %505 = vst [vmem:[#allocation2 + $0x8] sm:$0xff] %v503
        %v506 = vld [vmem:[#allocation6 + $0x4] sm:$0xf]
        %v507 = vld [vmem:[#allocation6 + $0xc] sm:$0xf]
        %v508 = vld [vmem:[#allocation6 + $0x14] sm:$0xf]
        %v509 = vld [vmem:[#allocation6 + $0x1c] sm:$0xf]
        %v510 = vld [vmem:[#allocation6 + $0x24] sm:$0xf]
        %v511 = vld [vmem:[#allocation6 + $0x2c] sm:$0xf]
        %v512 = vld [vmem:[#allocation6 + $0x34] sm:$0xf]
        %v513 = vld [vmem:[#allocation6 + $0x3c] sm:$0xf]
        %v514 = vld [vmem:[#allocation6 + $0x44] sm:$0xf]
        %v515 = vld [vmem:[#allocation6 + $0x4c] sm:$0xf]
        %v516 = vld [vmem:[#allocation6 + $0x54] sm:$0xf]
        %v517 = vld [vmem:[#allocation6 + $0x5c] sm:$0xf]
        %v518 = vld [vmem:[#allocation6 + $0x64] sm:$0xf]
        %v519 = vld [vmem:[#allocation6 + $0x6c] sm:$0xf]
        %v520 = vld [vmem:[#allocation6 + $0x74] sm:$0xf]
        %v521 = vld [vmem:[#allocation6 + $0x7c] sm:$0xf]
        %v522 = vld [vmem:[%s2 + $0x1] sm:$0x1]
        %v524 = vlaneseq
        %v525 = vshrl.u32 %v524, 7
        %v526 = vsub.s32 0, %v525
        %v527 = vrot.slane %v522, %v526
        %v545 = vunpack.c.l.b16 %v506
        %v546 = vunpack.c.l.b16 %v507
        %v547 = vunpack.c.l.b16 %v508
        %v548 = vunpack.c.l.b16 %v509
        %v549 = vunpack.c.l.b16 %v510
        %v550 = vunpack.c.l.b16 %v511
        %v551 = vunpack.c.l.b16 %v512
        %v552 = vunpack.c.l.b16 %v513
        %v553 = vunpack.c.l.b16 %v514
        %v554 = vunpack.c.l.b16 %v515
        %v555 = vunpack.c.l.b16 %v516
        %v556 = vunpack.c.l.b16 %v517
        %v557 = vunpack.c.l.b16 %v518
        %v558 = vunpack.c.l.b16 %v519
        %v559 = vunpack.c.l.b16 %v520
        %v560 = vunpack.c.l.b16 %v521
        %v561 = vpack.c.b16 %v546, %v545
        %v562 = vpack.c.b16 %v548, %v547
        %v563 = vpack.c.b16 %v550, %v549
        %v564 = vpack.c.b16 %v552, %v551
        %v565 = vpack.c.b16 %v554, %v553
        %v566 = vpack.c.b16 %v556, %v555
        %v567 = vpack.c.b16 %v558, %v557
        %v568 = vpack.c.b16 %v560, %v559
        %577 = vmatprep.subr.bf16.mxu0 0
        %578 = vmatpush1.bf16.msra.mxu0 %v561
        %579 = vmatprep.subr.bf16.mxu0 0
        %580 = vmatpush1.bf16.msra.mxu0 %v562
        %581 = vmatprep.subr.bf16.mxu0 0
        %582 = vmatpush1.bf16.msra.mxu0 %v563
        %583 = vmatprep.subr.bf16.mxu0 0
        %584 = vmatpush1.bf16.msra.mxu0 %v564
        %585 = vmatprep.subr.bf16.mxu0 0
        %586 = vmatpush1.bf16.msra.mxu0 %v565
        %587 = vmatprep.subr.bf16.mxu0 0
        %588 = vmatpush1.bf16.msra.mxu0 %v566
        %589 = vmatprep.subr.bf16.mxu0 0
        %590 = vmatpush1.bf16.msra.mxu0 %v567
        %591 = vmatprep.subr.bf16.mxu0 0
        %592 = vmatpush1.bf16.msra.mxu0 %v568
        %593 = vmatprep.subr.bf16.mxu0 0
        %594 = vmatpush1.bf16.msra.mxu0 0
        %595 = vmatprep.subr.bf16.mxu0 0
        %596 = vmatpush1.bf16.msra.mxu0 0
        %597 = vmatprep.subr.bf16.mxu0 0
        %598 = vmatpush1.bf16.msra.mxu0 0
        %599 = vmatprep.subr.bf16.mxu0 0
        %600 = vmatpush1.bf16.msra.mxu0 0
        %601 = vmatprep.subr.bf16.mxu0 0
        %602 = vmatpush1.bf16.msra.mxu0 0
        %603 = vmatprep.subr.bf16.mxu0 0
        %604 = vmatpush1.bf16.msra.mxu0 0
        %605 = vmatprep.subr.bf16.mxu0 0
        %606 = vmatpush1.bf16.msra.mxu0 0
        %607 = vmatprep.subr.bf16.mxu0 0
        %608 = vmatpush1.bf16.msra.mxu0 0
        %609 = vmatprep.mubr.bf16.mxu0 0
        %610 = vmatmul.mubr.bf16.gmra.mrb[0].mxu0 %v277
        %v611 = vpop.f32.mrb[0].mxu0
        %v612 = vadd.f32 %v527, %v611
        %v613 = vpop.f32.mrb[0].mxu0
        %v614 = vpop.f32.mrb[0].mxu0
        %v615 = vadd.f32 %v527, %v614
        %v616 = vpop.f32.mrb[0].mxu0
        %617 = vdwg.mxu0
        %v618 = vmax.f32 %v612, 0.0
        %v619 = vmax.f32 %v615, 0.0
        %v620 = vld [vmem:[#allocation2] sm:$0xff]
        %v621 = vld [vmem:[#allocation2 + $0x8] sm:$0xff]
        %v622 = vpack.c.bf16 %v619, %v618
        %v623 = vld [vmem:[#allocation8 + $0x40] sm:$0xf]
        %v624 = vld [vmem:[#allocation8 + $0x44] sm:$0xf]
        %v625 = vld [vmem:[#allocation8 + $0x48] sm:$0xf]
        %v626 = vld [vmem:[#allocation8 + $0x4c] sm:$0xf]
        %v627 = vld [vmem:[#allocation8 + $0x50] sm:$0xf]
        %v628 = vld [vmem:[#allocation8 + $0x54] sm:$0xf]
        %v629 = vld [vmem:[#allocation8 + $0x58] sm:$0xf]
        %v630 = vld [vmem:[#allocation8 + $0x5c] sm:$0xf]
        %v631 = vld [vmem:[#allocation8 + $0x60] sm:$0xf]
        %v632 = vld [vmem:[#allocation8 + $0x64] sm:$0xf]
        %v633 = vld [vmem:[#allocation8 + $0x68] sm:$0xf]
        %v634 = vld [vmem:[#allocation8 + $0x6c] sm:$0xf]
        %v635 = vld [vmem:[#allocation8 + $0x70] sm:$0xf]
        %v636 = vld [vmem:[#allocation8 + $0x74] sm:$0xf]
        %v637 = vld [vmem:[#allocation8 + $0x78] sm:$0xf]
        %v638 = vld [vmem:[#allocation8 + $0x7c] sm:$0xf]
        %v655 = vunpack.c.l.b16 %v623
        %v656 = vunpack.c.l.b16 %v624
        %v657 = vunpack.c.l.b16 %v625
        %v658 = vunpack.c.l.b16 %v626
        %v659 = vunpack.c.l.b16 %v627
        %v660 = vunpack.c.l.b16 %v628
        %v661 = vunpack.c.l.b16 %v629
        %v662 = vunpack.c.l.b16 %v630
        %v663 = vunpack.c.l.b16 %v631
        %v664 = vunpack.c.l.b16 %v632
        %v665 = vunpack.c.l.b16 %v633
        %v666 = vunpack.c.l.b16 %v634
        %v667 = vunpack.c.l.b16 %v635
        %v668 = vunpack.c.l.b16 %v636
        %v669 = vunpack.c.l.b16 %v637
        %v670 = vunpack.c.l.b16 %v638
        %v671 = vpack.c.b16 %v656, %v655
        %v672 = vpack.c.b16 %v658, %v657
        %v673 = vpack.c.b16 %v660, %v659
        %v674 = vpack.c.b16 %v662, %v661
        %v675 = vpack.c.b16 %v664, %v663
        %v676 = vpack.c.b16 %v666, %v665
        %v677 = vpack.c.b16 %v668, %v667
        %v678 = vpack.c.b16 %v670, %v669
        %687 = vmatprep.subr.bf16.mxu0 0
        %688 = vmatpush1.bf16.msra.mxu0 %v671
        %689 = vmatprep.subr.bf16.mxu0 0
        %690 = vmatpush1.bf16.msra.mxu0 %v672
        %691 = vmatprep.subr.bf16.mxu0 0
        %692 = vmatpush1.bf16.msra.mxu0 %v673
        %693 = vmatprep.subr.bf16.mxu0 0
        %694 = vmatpush1.bf16.msra.mxu0 %v674
        %695 = vmatprep.subr.bf16.mxu0 0
        %696 = vmatpush1.bf16.msra.mxu0 %v675
        %697 = vmatprep.subr.bf16.mxu0 0
        %698 = vmatpush1.bf16.msra.mxu0 %v676
        %699 = vmatprep.subr.bf16.mxu0 0
        %700 = vmatpush1.bf16.msra.mxu0 %v677
        %701 = vmatprep.subr.bf16.mxu0 0
        %702 = vmatpush1.bf16.msra.mxu0 %v678
        %703 = vmatprep.subr.bf16.mxu0 0
        %704 = vmatpush1.bf16.msra.mxu0 0
        %705 = vmatprep.subr.bf16.mxu0 0
        %706 = vmatpush1.bf16.msra.mxu0 0
        %707 = vmatprep.subr.bf16.mxu0 0
        %708 = vmatpush1.bf16.msra.mxu0 0
        %709 = vmatprep.subr.bf16.mxu0 0
        %710 = vmatpush1.bf16.msra.mxu0 0
        %711 = vmatprep.subr.bf16.mxu0 0
        %712 = vmatpush1.bf16.msra.mxu0 0
        %713 = vmatprep.subr.bf16.mxu0 0
        %714 = vmatpush1.bf16.msra.mxu0 0
        %715 = vmatprep.subr.bf16.mxu0 0
        %716 = vmatpush1.bf16.msra.mxu0 0
        %717 = vmatprep.subr.bf16.mxu0 0
        %718 = vmatpush1.bf16.msra.mxu0 0
        %719 = vmatprep.mubr.bf16.mxu0 0
        %720 = vmatmul.mubr.bf16.gmra.mrb[0].mxu0 %v622
        %v721 = vpop.f32.mrb[0].mxu0
        %v722 = vadd.f32 0.0, %v721
        %v723 = vpop.f32.mrb[0].mxu0
        %v724 = vpop.f32.mrb[0].mxu0
        %v725 = vadd.f32 0.0, %v724
        %v726 = vpop.f32.mrb[0].mxu0
        %727 = vdwg.mxu0
        %v728 = vadd.f32 %v620, %v722
        %v729 = vadd.f32 %v621, %v725
        %730 = vst [vmem:[#allocation2] sm:$0xff] %v728
        %731 = vst [vmem:[#allocation2 + $0x8] sm:$0xff] %v729
        %v732 = vld [vmem:[#allocation2] sm:$0xff]
        %v733 = vld [vmem:[#allocation2 + $0x8] sm:$0xff]
        %v734 = vld [vmem:[%s4] sm:$0x1]
        %v736 = vlaneseq
        %v737 = vshrl.u32 %v736, 7
        %v738 = vsub.s32 0, %v737
        %v739 = vrot.slane %v734, %v738
        %v741 = vadd.f32 %v732, %v739
        %v742 = vadd.f32 %v733, %v739
        %v743 = vadd.f32 %v741, %v275
        %v744 = vadd.f32 %v742, %v276
        %745 = vst [vmem:[%s271] sm:$0xff] %v743
        %746 = vst [vmem:[%s271 + $0x8] sm:$0xff] %v744
        %s747 = sand.u32 %s141, 1
        %s748 = scalar_lea.sflag [#allocation5], %s747
        %s749 = sand.u32 %s141, 1
        %s750 = smul.addr %s749, 16
        %s751 = scalar_lea.vmem [#allocation9], %s750
        // Predicated region
        $region53: #{tpu_custom_call.1} parent=39 // pred_check
          %p752 = pneg %p151
        $region54: #{tpu_custom_call.1} parent=39 // pred_check_branch
          %754 = sbr.rel (%p752) target = $region56
        $region55: #{tpu_custom_call.1} parent=39 // pred_region
          %s755 = smul.u32 2, %s23
          %s757 = ssub.s32 256, 256
          %758 = vsyncadd %s748, %s757
          %s759 = smul.addr %s755, 128
          %s760 = scalar_lea.hbm %s5, %s759
          %s761 = sshll.u32 %s751, 4
          %s762 = int_to_ptr.vmem [resolvable:$true] %s761
          %767 = dma.vmem_to_hbm [thread:$0]  %s762, 256, %s760, %s748, 128, 128, 8
        $region56: #{tpu_custom_call.1} parent=39 // pred_fallthru
          _
      $region40: #{tpu_custom_call.1} parent=5 // pred_fallthru
        _
      %p768 = scmp.le.s32.totalorder 2, %s18
      // Predicated region
      $region57: #{tpu_custom_call.1} parent=5 // pred_check
        %p769 = pneg %p768
      $region58: #{tpu_custom_call.1} parent=5 // pred_check_branch
        %771 = sbr.rel (%p769) target = $region60
      $region59: #{tpu_custom_call.1} parent=5 // pred_region
        %s772 = ssub.s32 %s18, 2
        // Predicated region
        $region61: #{tpu_custom_call.1} parent=59 // pred_check
          %p773 = pneg %p157
        $region62: #{tpu_custom_call.1} parent=59 // pred_check_branch
          %775 = sbr.rel (%p773) target = $region64
        $region63: #{tpu_custom_call.1} parent=59 // pred_region
          %s776 = sand.u32 %s142, 1
          %s777 = scalar_lea.sflag [#allocation5], %s776
          %s778 = sand.u32 %s142, 1
          %s779 = smul.addr %s778, 16
          %s780 = scalar_lea.vmem [#allocation9], %s779
          %781 = dma.done %s777, 256
        $region64: #{tpu_custom_call.1} parent=59 // pred_fallthru
          _
      $region60: #{tpu_custom_call.1} parent=5 // pred_fallthru
        _
    $region6: #{tpu_custom_call.1} parent=1 // loop_footer
      %s22 = sadd.s32 1, %s18
    $region7: #{tpu_custom_call.1} parent=1 // loop_footer_branch
      %17 = sbr.rel target = $region3
    $region8: #{tpu_custom_call.1} parent=1 // loop_exit
      _
    %782 = vsyncpa [#allocation4], 1
    %s783 = scalar_lea.sflag [#allocation4], 1
    %784 = vsyncpa %s783, 1
    %785 = vsyncpa [#allocation7], 1
    %786 = vsyncpa [#allocation5], 1
    %s787 = scalar_lea.sflag [#allocation5], 1
    %788 = vsyncpa %s787, 1

// kernel: tpu_custom_call.1
$region0: #{tpu_custom_call.1}
  #allocation0 [shape = 'u32[]', space=smem, size = 0x4, offset = 0x4, fixed_abs, tag = 'smem constant byte address 0x4 - core index']
  #allocation1 [shape = 'u32[144,128]{1,0:T(1,128)}', space=vmem, size = 0x12000, scoped, tag = 'internal scratch']
  #allocation2 [shape = 'f32[16,128]{1,0:T(8,128)}', space=vmem, size = 0x2000, scoped, tag = 'scratch operand']
  %s0 = inlined_call_operand.hbm [shape: f32[32,128], index: 0, kind: input, shape index: {}]
  %s1 = inlined_call_operand.hbm [shape: bf16[128,256], index: 1, kind: input, shape index: {}]
  %s2 = inlined_call_operand.vmem [shape: f32[1,256], index: 2, kind: input, shape index: {}]
  %s3 = inlined_call_operand.hbm [shape: bf16[256,128], index: 3, kind: input, shape index: {}]
  %s4 = inlined_call_operand.vmem [shape: f32[1,128], index: 4, kind: input, shape index: {}]
  %s5 = inlined_call_operand.hbm [shape: f32[32,128], index: 5, kind: output, shape index: {}]
  %s6 = sld [smem:[#allocation0]]
  $region65: #{tpu_custom_call.1} parent=0
    _
  %s8 = ssub.s32 1, %s6
  %s9 = scalar_select 0, %s8, %s6
  $region1: #{tpu_custom_call.1} parent=0
    #allocation3 [shape = 'u8[16384]{0}', space=vmem, size = 0x4000, scoped, tag = 'input window, operand 0']
    #allocation4 [shape = 's32[2]{0}', space=sflag, size = 0x8, scoped, tag = 'scoped memory for tpu_custom_call.1']
    #allocation5 [shape = 's32[2]{0}', space=sflag, size = 0x8, scoped, tag = 'scoped memory for tpu_custom_call.1']
    #allocation6 [shape = 'u8[65536]{0}', space=vmem, size = 0x10000, scoped, tag = 'input window, operand 1, single buffered']
    #allocation7 [shape = 's32[1]{0}', space=sflag, size = 0x4, scoped, tag = 'scoped memory for tpu_custom_call.1']
    #allocation8 [shape = 'u8[65536]{0}', space=vmem, size = 0x10000, scoped, tag = 'input window, operand 3, single buffered']
    #allocation9 [shape = 'u8[16384]{0}', space=vmem, size = 0x4000, scoped, tag = 'output window, operand 0']
    %10 = vsyncpa [#allocation4], 0
    %s11 = scalar_lea.sflag [#allocation4], 1
    %12 = vsyncpa %s11, 0
    %13 = vsyncpa [#allocation7], 0
    %14 = vsyncpa [#allocation5], 0
    %s15 = scalar_lea.sflag [#allocation5], 1
    %16 = vsyncpa %s15, 0
    loop: start=0, step=1, limit=4
    $region2: #{tpu_custom_call.1} parent=1 // loop_pre_header
      _
    $region3: #{tpu_custom_call.1} parent=1 // loop_header
      %s18 = sphi 0, %s22
      %p19 = scmp.ge.s32.totalorder %s18, 4
      %s28 = sphi 0, %s30
      %s31 = sphi 0, %s28
      %s32 = sphi 0, %s31
      %s48 = sphi 0, %s32
      %s52 = sphi 0, %s52
      %s54 = sphi 0, %s52
      %s55 = sphi 0, %s54
      %s69 = sphi 0, %s55
      %s73 = sphi 0, %s73
      %s75 = sphi 0, %s73
      %s76 = sphi 0, %s75
      %s90 = sphi 0, %s76
      %s94 = sphi 0, %s94
      %s96 = sphi 0, %s94
      %s97 = sphi 0, %s96
      %s111 = sphi 0, %s97
      %s115 = sphi 0, %s115
      %s117 = sphi 0, %s115
      %s118 = sphi 0, %s117
      %s132 = sphi 0, %s118
      %s138 = sphi 0, %s140
      %s141 = sphi 0, %s138
      %s142 = sphi 0, %s141
      %s158 = sphi 0, %s142
    $region4: #{tpu_custom_call.1} parent=1 // loop_header_branch
      %21 = sbr.rel (%p19) target = $region8
    $region5: #{tpu_custom_call.1} parent=1 // loop_body
      %s23 = ssub.s32 %s18, 1
      %s24 = ssub.s32 %s18, 2
      %s25 = sadd.s32 %s18, 1
      %s26 = ssub.s32 %s18, %s25
      %p27 = scmp.eq.s32.totalorder %s26, 0
      %s29 = sadd.s32 %s28, 1
      %s30 = scalar_select %p27, %s28, %s29
      %p33 = pneg %p27
      %p34 = scmp.eq.s32.totalorder %s18, 1
      %p35 = por %p33, %p34
      %p36 = scmp.ne.s32.totalorder %s28, %s31
      %p37 = scmp.eq.s32.totalorder %s18, 0
      %p38 = por %p36, %p37
      %p39 = scmp.ne.s32.totalorder %s28, %s31
      %p40 = scmp.eq.s32.totalorder %s23, 1
      %p41 = por %p39, %p40
      %p42 = scmp.ne.s32.totalorder %s31, %s32
      %p43 = scmp.eq.s32.totalorder %s23, 0
      %p44 = por %p42, %p43
      %p45 = scmp.ne.s32.totalorder %s31, %s32
      %p46 = scmp.eq.s32.totalorder %s24, 1
      %p47 = por %p45, %p46
      %p49 = scmp.ne.s32.totalorder %s32, %s48
      %p50 = scmp.eq.s32.totalorder %s24, 0
      %p51 = por %p49, %p50
      %s53 = sadd.s32 %s52, 1
      %p56 = scmp.eq.s32.totalorder %s18, 1
      %p57 = scmp.ne.s32.totalorder %s52, %s54
      %p58 = scmp.eq.s32.totalorder %s18, 0
      %p59 = por %p57, %p58
      %p60 = scmp.ne.s32.totalorder %s52, %s54
      %p61 = scmp.eq.s32.totalorder %s23, 1
      %p62 = por %p60, %p61
      %p63 = scmp.ne.s32.totalorder %s54, %s55
      %p64 = scmp.eq.s32.totalorder %s23, 0
      %p65 = por %p63, %p64
      %p66 = scmp.ne.s32.totalorder %s54, %s55
      %p67 = scmp.eq.s32.totalorder %s24, 1
      %p68 = por %p66, %p67
      %p70 = scmp.ne.s32.totalorder %s55, %s69
      %p71 = scmp.eq.s32.totalorder %s24, 0
      %p72 = por %p70, %p71
      %s74 = sadd.s32 %s73, 1
      %p77 = scmp.eq.s32.totalorder %s18, 1
      %p78 = scmp.ne.s32.totalorder %s73, %s75
      %p79 = scmp.eq.s32.totalorder %s18, 0
      %p80 = por %p78, %p79
      %p81 = scmp.ne.s32.totalorder %s73, %s75
      %p82 = scmp.eq.s32.totalorder %s23, 1
      %p83 = por %p81, %p82
      %p84 = scmp.ne.s32.totalorder %s75, %s76
      %p85 = scmp.eq.s32.totalorder %s23, 0
      %p86 = por %p84, %p85
      %p87 = scmp.ne.s32.totalorder %s75, %s76
      %p88 = scmp.eq.s32.totalorder %s24, 1
      %p89 = por %p87, %p88
      %p91 = scmp.ne.s32.totalorder %s76, %s90
      %p92 = scmp.eq.s32.totalorder %s24, 0
      %p93 = por %p91, %p92
      %s95 = sadd.s32 %s94, 1
      %p98 = scmp.eq.s32.totalorder %s18, 1
      %p99 = scmp.ne.s32.totalorder %s94, %s96
      %p100 = scmp.eq.s32.totalorder %s18, 0
      %p101 = por %p99, %p100
      %p102 = scmp.ne.s32.totalorder %s94, %s96
      %p103 = scmp.eq.s32.totalorder %s23, 1
      %p104 = por %p102, %p103
      %p105 = scmp.ne.s32.totalorder %s96, %s97
      %p106 = scmp.eq.s32.totalorder %s23, 0
      %p107 = por %p105, %p106
      %p108 = scmp.ne.s32.totalorder %s96, %s97
      %p109 = scmp.eq.s32.totalorder %s24, 1
      %p110 = por %p108, %p109
      %p112 = scmp.ne.s32.totalorder %s97, %s111
      %p113 = scmp.eq.s32.totalorder %s24, 0
      %p114 = por %p112, %p113
      %s116 = sadd.s32 %s115, 1
      %p119 = scmp.eq.s32.totalorder %s18, 1
      %p120 = scmp.ne.s32.totalorder %s115, %s117
      %p121 = scmp.eq.s32.totalorder %s18, 0
      %p122 = por %p120, %p121
      %p123 = scmp.ne.s32.totalorder %s115, %s117
      %p124 = scmp.eq.s32.totalorder %s23, 1
      %p125 = por %p123, %p124
      %p126 = scmp.ne.s32.totalorder %s117, %s118
      %p127 = scmp.eq.s32.totalorder %s23, 0
      %p128 = por %p126, %p127
      %p129 = scmp.ne.s32.totalorder %s117, %s118
      %p130 = scmp.eq.s32.totalorder %s24, 1
      %p131 = por %p129, %p130
      %p133 = scmp.ne.s32.totalorder %s118, %s132
      %p134 = scmp.eq.s32.totalorder %s24, 0
      %p135 = por %p133, %p134
      %s136 = ssub.s32 %s18, %s25
      %p137 = scmp.eq.s32.totalorder %s136, 0
      %s139 = sadd.s32 %s138, 1
      %s140 = scalar_select %p137, %s138, %s139
      %p143 = pneg %p137
      %p144 = scmp.eq.s32.totalorder %s18, 1
      %p145 = por %p143, %p144
      %p146 = scmp.ne.s32.totalorder %s138, %s141
      %p147 = scmp.eq.s32.totalorder %s18, 0
      %p148 = por %p146, %p147
      %p149 = scmp.ne.s32.totalorder %s138, %s141
      %p150 = scmp.eq.s32.totalorder %s23, 1
      %p151 = por %p149, %p150
      %p152 = scmp.ne.s32.totalorder %s141, %s142
      %p153 = scmp.eq.s32.totalorder %s23, 0
      %p154 = por %p152, %p153
      %p155 = scmp.ne.s32.totalorder %s141, %s142
      %p156 = scmp.eq.s32.totalorder %s24, 1
      %p157 = por %p155, %p156
      %p159 = scmp.ne.s32.totalorder %s142, %s158
      %p160 = scmp.eq.s32.totalorder %s24, 0
      %p161 = por %p159, %p160
      %p162 = scmp.le.s32.totalorder 1, %s18
      %p163 = scmp.lt.s32.totalorder %s18, 3
      %p164 = pnand %p162, %p163
      %p165 = pneg %p164
      // Predicated region
      $region9: #{tpu_custom_call.1} parent=5 // pred_check
        _
      $region10: #{tpu_custom_call.1} parent=5 // pred_check_branch
        %167 = sbr.rel (%p164) target = $region12
      $region11: #{tpu_custom_call.1} parent=5 // pred_region
        %s168 = ssub.s32 %s18, 1
        // Predicated region
        $region13: #{tpu_custom_call.1} parent=11 // pred_check
          %p169 = pneg %p65
        $region14: #{tpu_custom_call.1} parent=11 // pred_check_branch
          %171 = sbr.rel (%p169) target = $region16
        $region15: #{tpu_custom_call.1} parent=11 // pred_region
          %s173 = ssub.s32 2048, 2048
          %174 = vsyncadd [#allocation7], %s173
          %s175 = sshll.u32 [#allocation6], 4
          %s176 = int_to_ptr.vmem [resolvable:$true] %s175
          %181 = dma.hbm_to_vmem [thread:$0]  %s1, 2048, %s176, [#allocation7], 128, 128, 8
        $region16: #{tpu_custom_call.1} parent=11 // pred_fallthru
          _
        // Predicated region
        $region17: #{tpu_custom_call.1} parent=11 // pred_check
          %p182 = pneg %p86
        $region18: #{tpu_custom_call.1} parent=11 // pred_check_branch
          %184 = sbr.rel (%p182) target = $region20
        $region19: #{tpu_custom_call.1} parent=11 // pred_region
          _
        $region20: #{tpu_custom_call.1} parent=11 // pred_fallthru
          _
        // Predicated region
        $region21: #{tpu_custom_call.1} parent=11 // pred_check
          %p185 = pneg %p107
        $region22: #{tpu_custom_call.1} parent=11 // pred_check_branch
          %187 = sbr.rel (%p185) target = $region24
        $region23: #{tpu_custom_call.1} parent=11 // pred_region
          %s189 = ssub.s32 2048, 2048
          %190 = vsyncadd [#allocation7], %s189
          %s191 = sshll.u32 [#allocation8], 4
          %s192 = int_to_ptr.vmem [resolvable:$true] %s191
          %197 = dma.hbm_to_vmem [thread:$0]  %s3, 2048, %s192, [#allocation7], 64, 64, 4
        $region24: #{tpu_custom_call.1} parent=11 // pred_fallthru
          _
        // Predicated region
        $region25: #{tpu_custom_call.1} parent=11 // pred_check
          %p198 = pneg %p128
        $region26: #{tpu_custom_call.1} parent=11 // pred_check_branch
          %200 = sbr.rel (%p198) target = $region28
        $region27: #{tpu_custom_call.1} parent=11 // pred_region
          _
        $region28: #{tpu_custom_call.1} parent=11 // pred_fallthru
          _
      $region12: #{tpu_custom_call.1} parent=5 // pred_fallthru
        _
      %p201 = scmp.lt.s32.totalorder %s18, 2
      // Predicated region
      $region29: #{tpu_custom_call.1} parent=5 // pred_check
        %p202 = pneg %p201
      $region30: #{tpu_custom_call.1} parent=5 // pred_check_branch
        %204 = sbr.rel (%p202) target = $region32
      $region31: #{tpu_custom_call.1} parent=5 // pred_region
        // Predicated region
        $region33: #{tpu_custom_call.1} parent=31 // pred_check
          %p205 = pneg %p38
        $region34: #{tpu_custom_call.1} parent=31 // pred_check_branch
          %207 = sbr.rel (%p205) target = $region36
        $region35: #{tpu_custom_call.1} parent=31 // pred_region
          %s208 = sand.u32 %s28, 1
          %s209 = scalar_lea.sflag [#allocation4], %s208
          %s210 = sand.u32 %s28, 1
          %s211 = smul.addr %s210, 16
          %s212 = scalar_lea.vmem [#allocation3], %s211
          %s213 = smul.u32 2, %s18
          %s215 = ssub.s32 256, 256
          %216 = vsyncadd %s209, %s215
          %s217 = smul.addr %s213, 128
          %s218 = scalar_lea.hbm %s0, %s217
          %s219 = sshll.u32 %s212, 4
          %s220 = int_to_ptr.vmem [resolvable:$true] %s219
          %225 = dma.hbm_to_vmem [thread:$0]  %s218, 256, %s220, %s209, 128, 128, 8
        $region36: #{tpu_custom_call.1} parent=31 // pred_fallthru
          _
      $region32: #{tpu_custom_call.1} parent=5 // pred_fallthru
        _
      %p226 = scmp.le.s32.totalorder 1, %s18
      %p227 = scmp.lt.s32.totalorder %s18, 3
      %p228 = pnand %p226, %p227
      %p229 = pneg %p228
      // Predicated region
      $region37: #{tpu_custom_call.1} parent=5 // pred_check
        _
      $region38: #{tpu_custom_call.1} parent=5 // pred_check_branch
        %231 = sbr.rel (%p228) target = $region40
      $region39: #{tpu_custom_call.1} parent=5 // pred_region
        %s232 = ssub.s32 %s18, 1
        %s233 = sand.u32 %s31, 1
        %s234 = scalar_lea.sflag [#allocation4], %s233
        %s235 = sand.u32 %s31, 1
        %s236 = smul.addr %s235, 16
        %s237 = scalar_lea.vmem [#allocation3], %s236
        // Predicated region
        $region41: #{tpu_custom_call.1} parent=39 // pred_check
          %p238 = pneg %p44
        $region42: #{tpu_custom_call.1} parent=39 // pred_check_branch
          %240 = sbr.rel (%p238) target = $region44
        $region43: #{tpu_custom_call.1} parent=39 // pred_region
          %241 = dma.done %s234, 256
        $region44: #{tpu_custom_call.1} parent=39 // pred_fallthru
          _
        // Predicated region
        $region45: #{tpu_custom_call.1} parent=39 // pred_check
          %p242 = pneg %p65
        $region46: #{tpu_custom_call.1} parent=39 // pred_check_branch
          %244 = sbr.rel (%p242) target = $region48
        $region47: #{tpu_custom_call.1} parent=39 // pred_region
          %245 = dma.done [#allocation7], 2048
        $region48: #{tpu_custom_call.1} parent=39 // pred_fallthru
          _
        // Predicated region
        $region49: #{tpu_custom_call.1} parent=39 // pred_check
          %p246 = pneg %p107
        $region50: #{tpu_custom_call.1} parent=39 // pred_check_branch
          %248 = sbr.rel (%p246) target = $region52
        $region51: #{tpu_custom_call.1} parent=39 // pred_region
          %249 = dma.done [#allocation7], 2048
        $region52: #{tpu_custom_call.1} parent=39 // pred_fallthru
          _
        %s250 = sand.u32 %s31, 1
        %s251 = scalar_lea.sflag [#allocation4], %s250
        %s252 = sand.u32 %s31, 1
        %s253 = smul.addr %s252, 16
        %s254 = scalar_lea.vmem [#allocation3], %s253
        %p255 = pneg %p44
        %p256 = pneg %p41
        %p257 = pneg %p65
        %p258 = pneg %p62
        %p259 = pneg %p86
        %p260 = pneg %p83
        %p261 = pneg %p107
        %p262 = pneg %p104
        %p263 = pneg %p128
        %p264 = pneg %p125
        %p265 = pneg %p154
        %p266 = pneg %p151
        %s267 = sand.u32 %s141, 1
        %s268 = scalar_lea.sflag [#allocation5], %s267
        %s269 = sand.u32 %s141, 1
        %s270 = smul.addr %s269, 16
        %s271 = scalar_lea.vmem [#allocation9], %s270
        %s272 = smul.u32 2, %s23
        %s273 = smul.u32 2, %s23
        %v275 = vld [vmem:[%s237] sm:$0xff]
        %v276 = vld [vmem:[%s237 + $0x8] sm:$0xff]
        %v277 = vpack.c.bf16 %v276, %v275
        %278 = vst [vmem:[#allocation2] sm:$0xff] 0.0
        %279 = vst [vmem:[#allocation2 + $0x8] sm:$0xff] 0.0
        %v280 = vld [vmem:[#allocation6] sm:$0xf]
        %v281 = vld [vmem:[#allocation6 + $0x8] sm:$0xf]
        %v282 = vld [vmem:[#allocation6 + $0x10] sm:$0xf]
        %v283 = vld [vmem:[#allocation6 + $0x18] sm:$0xf]
        %v284 = vld [vmem:[#allocation6 + $0x20] sm:$0xf]
        %v285 = vld [vmem:[#allocation6 + $0x28] sm:$0xf]
        %v286 = vld [vmem:[#allocation6 + $0x30] sm:$0xf]
        %v287 = vld [vmem:[#allocation6 + $0x38] sm:$0xf]
        %v288 = vld [vmem:[#allocation6 + $0x40] sm:$0xf]
        %v289 = vld [vmem:[#allocation6 + $0x48] sm:$0xf]
        %v290 = vld [vmem:[#allocation6 + $0x50] sm:$0xf]
        %v291 = vld [vmem:[#allocation6 + $0x58] sm:$0xf]
        %v292 = vld [vmem:[#allocation6 + $0x60] sm:$0xf]
        %v293 = vld [vmem:[#allocation6 + $0x68] sm:$0xf]
        %v294 = vld [vmem:[#allocation6 + $0x70] sm:$0xf]
        %v295 = vld [vmem:[#allocation6 + $0x78] sm:$0xf]
        %v296 = vld [vmem:[%s2] sm:$0x1]
        %v298 = vlaneseq
        %v299 = vshrl.u32 %v298, 7
        %v300 = vsub.s32 0, %v299
        %v301 = vrot.slane %v296, %v300
        %v319 = vunpack.c.l.b16 %v280
        %v320 = vunpack.c.l.b16 %v281
        %v321 = vunpack.c.l.b16 %v282
        %v322 = vunpack.c.l.b16 %v283
        %v323 = vunpack.c.l.b16 %v284
        %v324 = vunpack.c.l.b16 %v285
        %v325 = vunpack.c.l.b16 %v286
        %v326 = vunpack.c.l.b16 %v287
        %v327 = vunpack.c.l.b16 %v288
        %v328 = vunpack.c.l.b16 %v289
        %v329 = vunpack.c.l.b16 %v290
        %v330 = vunpack.c.l.b16 %v291
        %v331 = vunpack.c.l.b16 %v292
        %v332 = vunpack.c.l.b16 %v293
        %v333 = vunpack.c.l.b16 %v294
        %v334 = vunpack.c.l.b16 %v295
        %v335 = vpack.c.b16 %v320, %v319
        %v336 = vpack.c.b16 %v322, %v321
        %v337 = vpack.c.b16 %v324, %v323
        %v338 = vpack.c.b16 %v326, %v325
        %v339 = vpack.c.b16 %v328, %v327
        %v340 = vpack.c.b16 %v330, %v329
        %v341 = vpack.c.b16 %v332, %v331
        %v342 = vpack.c.b16 %v334, %v333
        %351 = vmatprep.subr.bf16.mxu0 0
        %352 = vmatpush1.bf16.msra.mxu0 %v335
        %353 = vmatprep.subr.bf16.mxu0 0
        %354 = vmatpush1.bf16.msra.mxu0 %v336
        %355 = vmatprep.subr.bf16.mxu0 0
        %356 = vmatpush1.bf16.msra.mxu0 %v337
        %357 = vmatprep.subr.bf16.mxu0 0
        %358 = vmatpush1.bf16.msra.mxu0 %v338
        %359 = vmatprep.subr.bf16.mxu0 0
        %360 = vmatpush1.bf16.msra.mxu0 %v339
        %361 = vmatprep.subr.bf16.mxu0 0
        %362 = vmatpush1.bf16.msra.mxu0 %v340
        %363 = vmatprep.subr.bf16.mxu0 0
        %364 = vmatpush1.bf16.msra.mxu0 %v341
        %365 = vmatprep.subr.bf16.mxu0 0
        %366 = vmatpush1.bf16.msra.mxu0 %v342
        %367 = vmatprep.subr.bf16.mxu0 0
        %368 = vmatpush1.bf16.msra.mxu0 0
        %369 = vmatprep.subr.bf16.mxu0 0
        %370 = vmatpush1.bf16.msra.mxu0 0
        %371 = vmatprep.subr.bf16.mxu0 0
        %372 = vmatpush1.bf16.msra.mxu0 0
        %373 = vmatprep.subr.bf16.mxu0 0
        %374 = vmatpush1.bf16.msra.mxu0 0
        %375 = vmatprep.subr.bf16.mxu0 0
        %376 = vmatpush1.bf16.msra.mxu0 0
        %377 = vmatprep.subr.bf16.mxu0 0
        %378 = vmatpush1.bf16.msra.mxu0 0
        %379 = vmatprep.subr.bf16.mxu0 0
        %380 = vmatpush1.bf16.msra.mxu0 0
        %381 = vmatprep.subr.bf16.mxu0 0
        %382 = vmatpush1.bf16.msra.mxu0 0
        %383 = vmatprep.mubr.bf16.mxu0 0
        %384 = vmatmul.mubr.bf16.gmra.mrb[0].mxu0 %v277
        %v385 = vpop.f32.mrb[0].mxu0
        %v386 = vadd.f32 %v301, %v385
        %v387 = vpop.f32.mrb[0].mxu0
        %v388 = vpop.f32.mrb[0].mxu0
        %v389 = vadd.f32 %v301, %v388
        %v390 = vpop.f32.mrb[0].mxu0
        %391 = vdwg.mxu0
        %v392 = vmax.f32 %v386, 0.0
        %v393 = vmax.f32 %v389, 0.0
        %v394 = vld [vmem:[#allocation2] sm:$0xff]
        %v395 = vld [vmem:[#allocation2 + $0x8] sm:$0xff]
        %v396 = vpack.c.bf16 %v393, %v392
        %v397 = vld [vmem:[#allocation8] sm:$0xf]
        %v398 = vld [vmem:[#allocation8 + $0x4] sm:$0xf]
        %v399 = vld [vmem:[#allocation8 + $0x8] sm:$0xf]
        %v400 = vld [vmem:[#allocation8 + $0xc] sm:$0xf]
        %v401 = vld [vmem:[#allocation8 + $0x10] sm:$0xf]
        %v402 = vld [vmem:[#allocation8 + $0x14] sm:$0xf]
        %v403 = vld [vmem:[#allocation8 + $0x18] sm:$0xf]
        %v404 = vld [vmem:[#allocation8 + $0x1c] sm:$0xf]
        %v405 = vld [vmem:[#allocation8 + $0x20] sm:$0xf]
        %v406 = vld [vmem:[#allocation8 + $0x24] sm:$0xf]
        %v407 = vld [vmem:[#allocation8 + $0x28] sm:$0xf]
        %v408 = vld [vmem:[#allocation8 + $0x2c] sm:$0xf]
        %v409 = vld [vmem:[#allocation8 + $0x30] sm:$0xf]
        %v410 = vld [vmem:[#allocation8 + $0x34] sm:$0xf]
        %v411 = vld [vmem:[#allocation8 + $0x38] sm:$0xf]
        %v412 = vld [vmem:[#allocation8 + $0x3c] sm:$0xf]
        %v429 = vunpack.c.l.b16 %v397
        %v430 = vunpack.c.l.b16 %v398
        %v431 = vunpack.c.l.b16 %v399
        %v432 = vunpack.c.l.b16 %v400
        %v433 = vunpack.c.l.b16 %v401
        %v434 = vunpack.c.l.b16 %v402
        %v435 = vunpack.c.l.b16 %v403
        %v436 = vunpack.c.l.b16 %v404
        %v437 = vunpack.c.l.b16 %v405
        %v438 = vunpack.c.l.b16 %v406
        %v439 = vunpack.c.l.b16 %v407
        %v440 = vunpack.c.l.b16 %v408
        %v441 = vunpack.c.l.b16 %v409
        %v442 = vunpack.c.l.b16 %v410
        %v443 = vunpack.c.l.b16 %v411
        %v444 = vunpack.c.l.b16 %v412
        %v445 = vpack.c.b16 %v430, %v429
        %v446 = vpack.c.b16 %v432, %v431
        %v447 = vpack.c.b16 %v434, %v433
        %v448 = vpack.c.b16 %v436, %v435
        %v449 = vpack.c.b16 %v438, %v437
        %v450 = vpack.c.b16 %v440, %v439
        %v451 = vpack.c.b16 %v442, %v441
        %v452 = vpack.c.b16 %v444, %v443
        %461 = vmatprep.subr.bf16.mxu0 0
        %462 = vmatpush1.bf16.msra.mxu0 %v445
        %463 = vmatprep.subr.bf16.mxu0 0
        %464 = vmatpush1.bf16.msra.mxu0 %v446
        %465 = vmatprep.subr.bf16.mxu0 0
        %466 = vmatpush1.bf16.msra.mxu0 %v447
        %467 = vmatprep.subr.bf16.mxu0 0
        %468 = vmatpush1.bf16.msra.mxu0 %v448
        %469 = vmatprep.subr.bf16.mxu0 0
        %470 = vmatpush1.bf16.msra.mxu0 %v449
        %471 = vmatprep.subr.bf16.mxu0 0
        %472 = vmatpush1.bf16.msra.mxu0 %v450
        %473 = vmatprep.subr.bf16.mxu0 0
        %474 = vmatpush1.bf16.msra.mxu0 %v451
        %475 = vmatprep.subr.bf16.mxu0 0
        %476 = vmatpush1.bf16.msra.mxu0 %v452
        %477 = vmatprep.subr.bf16.mxu0 0
        %478 = vmatpush1.bf16.msra.mxu0 0
        %479 = vmatprep.subr.bf16.mxu0 0
        %480 = vmatpush1.bf16.msra.mxu0 0
        %481 = vmatprep.subr.bf16.mxu0 0
        %482 = vmatpush1.bf16.msra.mxu0 0
        %483 = vmatprep.subr.bf16.mxu0 0
        %484 = vmatpush1.bf16.msra.mxu0 0
        %485 = vmatprep.subr.bf16.mxu0 0
        %486 = vmatpush1.bf16.msra.mxu0 0
        %487 = vmatprep.subr.bf16.mxu0 0
        %488 = vmatpush1.bf16.msra.mxu0 0
        %489 = vmatprep.subr.bf16.mxu0 0
        %490 = vmatpush1.bf16.msra.mxu0 0
        %491 = vmatprep.subr.bf16.mxu0 0
        %492 = vmatpush1.bf16.msra.mxu0 0
        %493 = vmatprep.mubr.bf16.mxu0 0
        %494 = vmatmul.mubr.bf16.gmra.mrb[0].mxu0 %v396
        %v495 = vpop.f32.mrb[0].mxu0
        %v496 = vadd.f32 0.0, %v495
        %v497 = vpop.f32.mrb[0].mxu0
        %v498 = vpop.f32.mrb[0].mxu0
        %v499 = vadd.f32 0.0, %v498
        %v500 = vpop.f32.mrb[0].mxu0
        %501 = vdwg.mxu0
        %v502 = vadd.f32 %v394, %v496
        %v503 = vadd.f32 %v395, %v499
        %504 = vst [vmem:[#allocation2] sm:$0xff] %v502
        %505 = vst [vmem:[#allocation2 + $0x8] sm:$0xff] %v503
        %v506 = vld [vmem:[#allocation6 + $0x4] sm:$0xf]
        %v507 = vld [vmem:[#allocation6 + $0xc] sm:$0xf]
        %v508 = vld [vmem:[#allocation6 + $0x14] sm:$0xf]
        %v509 = vld [vmem:[#allocation6 + $0x1c] sm:$0xf]
        %v510 = vld [vmem:[#allocation6 + $0x24] sm:$0xf]
        %v511 = vld [vmem:[#allocation6 + $0x2c] sm:$0xf]
        %v512 = vld [vmem:[#allocation6 + $0x34] sm:$0xf]
        %v513 = vld [vmem:[#allocation6 + $0x3c] sm:$0xf]
        %v514 = vld [vmem:[#allocation6 + $0x44] sm:$0xf]
        %v515 = vld [vmem:[#allocation6 + $0x4c] sm:$0xf]
        %v516 = vld [vmem:[#allocation6 + $0x54] sm:$0xf]
        %v517 = vld [vmem:[#allocation6 + $0x5c] sm:$0xf]
        %v518 = vld [vmem:[#allocation6 + $0x64] sm:$0xf]
        %v519 = vld [vmem:[#allocation6 + $0x6c] sm:$0xf]
        %v520 = vld [vmem:[#allocation6 + $0x74] sm:$0xf]
        %v521 = vld [vmem:[#allocation6 + $0x7c] sm:$0xf]
        %v522 = vld [vmem:[%s2 + $0x1] sm:$0x1]
        %v524 = vlaneseq
        %v525 = vshrl.u32 %v524, 7
        %v526 = vsub.s32 0, %v525
        %v527 = vrot.slane %v522, %v526
        %v545 = vunpack.c.l.b16 %v506
        %v546 = vunpack.c.l.b16 %v507
        %v547 = vunpack.c.l.b16 %v508
        %v548 = vunpack.c.l.b16 %v509
        %v549 = vunpack.c.l.b16 %v510
        %v550 = vunpack.c.l.b16 %v511
        %v551 = vunpack.c.l.b16 %v512
        %v552 = vunpack.c.l.b16 %v513
        %v553 = vunpack.c.l.b16 %v514
        %v554 = vunpack.c.l.b16 %v515
        %v555 = vunpack.c.l.b16 %v516
        %v556 = vunpack.c.l.b16 %v517
        %v557 = vunpack.c.l.b16 %v518
        %v558 = vunpack.c.l.b16 %v519
        %v559 = vunpack.c.l.b16 %v520
        %v560 = vunpack.c.l.b16 %v521
        %v561 = vpack.c.b16 %v546, %v545
        %v562 = vpack.c.b16 %v548, %v547
        %v563 = vpack.c.b16 %v550, %v549
        %v564 = vpack.c.b16 %v552, %v551
        %v565 = vpack.c.b16 %v554, %v553
        %v566 = vpack.c.b16 %v556, %v555
        %v567 = vpack.c.b16 %v558, %v557
        %v568 = vpack.c.b16 %v560, %v559
        %577 = vmatprep.subr.bf16.mxu0 0
        %578 = vmatpush1.bf16.msra.mxu0 %v561
        %579 = vmatprep.subr.bf16.mxu0 0
        %580 = vmatpush1.bf16.msra.mxu0 %v562
        %581 = vmatprep.subr.bf16.mxu0 0
        %582 = vmatpush1.bf16.msra.mxu0 %v563
        %583 = vmatprep.subr.bf16.mxu0 0
        %584 = vmatpush1.bf16.msra.mxu0 %v564
        %585 = vmatprep.subr.bf16.mxu0 0
        %586 = vmatpush1.bf16.msra.mxu0 %v565
        %587 = vmatprep.subr.bf16.mxu0 0
        %588 = vmatpush1.bf16.msra.mxu0 %v566
        %589 = vmatprep.subr.bf16.mxu0 0
        %590 = vmatpush1.bf16.msra.mxu0 %v567
        %591 = vmatprep.subr.bf16.mxu0 0
        %592 = vmatpush1.bf16.msra.mxu0 %v568
        %593 = vmatprep.subr.bf16.mxu0 0
        %594 = vmatpush1.bf16.msra.mxu0 0
        %595 = vmatprep.subr.bf16.mxu0 0
        %596 = vmatpush1.bf16.msra.mxu0 0
        %597 = vmatprep.subr.bf16.mxu0 0
        %598 = vmatpush1.bf16.msra.mxu0 0
        %599 = vmatprep.subr.bf16.mxu0 0
        %600 = vmatpush1.bf16.msra.mxu0 0
        %601 = vmatprep.subr.bf16.mxu0 0
        %602 = vmatpush1.bf16.msra.mxu0 0
        %603 = vmatprep.subr.bf16.mxu0 0
        %604 = vmatpush1.bf16.msra.mxu0 0
        %605 = vmatprep.subr.bf16.mxu0 0
        %606 = vmatpush1.bf16.msra.mxu0 0
        %607 = vmatprep.subr.bf16.mxu0 0
        %608 = vmatpush1.bf16.msra.mxu0 0
        %609 = vmatprep.mubr.bf16.mxu0 0
        %610 = vmatmul.mubr.bf16.gmra.mrb[0].mxu0 %v277
        %v611 = vpop.f32.mrb[0].mxu0
        %v612 = vadd.f32 %v527, %v611
        %v613 = vpop.f32.mrb[0].mxu0
        %v614 = vpop.f32.mrb[0].mxu0
        %v615 = vadd.f32 %v527, %v614
        %v616 = vpop.f32.mrb[0].mxu0
        %617 = vdwg.mxu0
        %v618 = vmax.f32 %v612, 0.0
        %v619 = vmax.f32 %v615, 0.0
        %v620 = vld [vmem:[#allocation2] sm:$0xff]
        %v621 = vld [vmem:[#allocation2 + $0x8] sm:$0xff]
        %v622 = vpack.c.bf16 %v619, %v618
        %v623 = vld [vmem:[#allocation8 + $0x40] sm:$0xf]
        %v624 = vld [vmem:[#allocation8 + $0x44] sm:$0xf]
        %v625 = vld [vmem:[#allocation8 + $0x48] sm:$0xf]
        %v626 = vld [vmem:[#allocation8 + $0x4c] sm:$0xf]
        %v627 = vld [vmem:[#allocation8 + $0x50] sm:$0xf]
        %v628 = vld [vmem:[#allocation8 + $0x54] sm:$0xf]
        %v629 = vld [vmem:[#allocation8 + $0x58] sm:$0xf]
        %v630 = vld [vmem:[#allocation8 + $0x5c] sm:$0xf]
        %v631 = vld [vmem:[#allocation8 + $0x60] sm:$0xf]
        %v632 = vld [vmem:[#allocation8 + $0x64] sm:$0xf]
        %v633 = vld [vmem:[#allocation8 + $0x68] sm:$0xf]
        %v634 = vld [vmem:[#allocation8 + $0x6c] sm:$0xf]
        %v635 = vld [vmem:[#allocation8 + $0x70] sm:$0xf]
        %v636 = vld [vmem:[#allocation8 + $0x74] sm:$0xf]
        %v637 = vld [vmem:[#allocation8 + $0x78] sm:$0xf]
        %v638 = vld [vmem:[#allocation8 + $0x7c] sm:$0xf]
        %v655 = vunpack.c.l.b16 %v623
        %v656 = vunpack.c.l.b16 %v624
        %v657 = vunpack.c.l.b16 %v625
        %v658 = vunpack.c.l.b16 %v626
        %v659 = vunpack.c.l.b16 %v627
        %v660 = vunpack.c.l.b16 %v628
        %v661 = vunpack.c.l.b16 %v629
        %v662 = vunpack.c.l.b16 %v630
        %v663 = vunpack.c.l.b16 %v631
        %v664 = vunpack.c.l.b16 %v632
        %v665 = vunpack.c.l.b16 %v633
        %v666 = vunpack.c.l.b16 %v634
        %v667 = vunpack.c.l.b16 %v635
        %v668 = vunpack.c.l.b16 %v636
        %v669 = vunpack.c.l.b16 %v637
        %v670 = vunpack.c.l.b16 %v638
        %v671 = vpack.c.b16 %v656, %v655
        %v672 = vpack.c.b16 %v658, %v657
        %v673 = vpack.c.b16 %v660, %v659
        %v674 = vpack.c.b16 %v662, %v661
        %v675 = vpack.c.b16 %v664, %v663
        %v676 = vpack.c.b16 %v666, %v665
        %v677 = vpack.c.b16 %v668, %v667
        %v678 = vpack.c.b16 %v670, %v669
        %687 = vmatprep.subr.bf16.mxu0 0
        %688 = vmatpush1.bf16.msra.mxu0 %v671
        %689 = vmatprep.subr.bf16.mxu0 0
        %690 = vmatpush1.bf16.msra.mxu0 %v672
        %691 = vmatprep.subr.bf16.mxu0 0
        %692 = vmatpush1.bf16.msra.mxu0 %v673
        %693 = vmatprep.subr.bf16.mxu0 0
        %694 = vmatpush1.bf16.msra.mxu0 %v674
        %695 = vmatprep.subr.bf16.mxu0 0
        %696 = vmatpush1.bf16.msra.mxu0 %v675
        %697 = vmatprep.subr.bf16.mxu0 0
        %698 = vmatpush1.bf16.msra.mxu0 %v676
        %699 = vmatprep.subr.bf16.mxu0 0
        %700 = vmatpush1.bf16.msra.mxu0 %v677
        %701 = vmatprep.subr.bf16.mxu0 0
        %702 = vmatpush1.bf16.msra.mxu0 %v678
        %703 = vmatprep.subr.bf16.mxu0 0
        %704 = vmatpush1.bf16.msra.mxu0 0
        %705 = vmatprep.subr.bf16.mxu0 0
        %706 = vmatpush1.bf16.msra.mxu0 0
        %707 = vmatprep.subr.bf16.mxu0 0
        %708 = vmatpush1.bf16.msra.mxu0 0
        %709 = vmatprep.subr.bf16.mxu0 0
        %710 = vmatpush1.bf16.msra.mxu0 0
        %711 = vmatprep.subr.bf16.mxu0 0
        %712 = vmatpush1.bf16.msra.mxu0 0
        %713 = vmatprep.subr.bf16.mxu0 0
        %714 = vmatpush1.bf16.msra.mxu0 0
        %715 = vmatprep.subr.bf16.mxu0 0
        %716 = vmatpush1.bf16.msra.mxu0 0
        %717 = vmatprep.subr.bf16.mxu0 0
        %718 = vmatpush1.bf16.msra.mxu0 0
        %719 = vmatprep.mubr.bf16.mxu0 0
        %720 = vmatmul.mubr.bf16.gmra.mrb[0].mxu0 %v622
        %v721 = vpop.f32.mrb[0].mxu0
        %v722 = vadd.f32 0.0, %v721
        %v723 = vpop.f32.mrb[0].mxu0
        %v724 = vpop.f32.mrb[0].mxu0
        %v725 = vadd.f32 0.0, %v724
        %v726 = vpop.f32.mrb[0].mxu0
        %727 = vdwg.mxu0
        %v728 = vadd.f32 %v620, %v722
        %v729 = vadd.f32 %v621, %v725
        %730 = vst [vmem:[#allocation2] sm:$0xff] %v728
        %731 = vst [vmem:[#allocation2 + $0x8] sm:$0xff] %v729
        %v732 = vld [vmem:[#allocation2] sm:$0xff]
        %v733 = vld [vmem:[#allocation2 + $0x8] sm:$0xff]
        %v734 = vld [vmem:[%s4] sm:$0x1]
        %v736 = vlaneseq
        %v737 = vshrl.u32 %v736, 7
        %v738 = vsub.s32 0, %v737
        %v739 = vrot.slane %v734, %v738
        %v741 = vadd.f32 %v732, %v739
        %v742 = vadd.f32 %v733, %v739
        %v743 = vadd.f32 %v741, %v275
        %v744 = vadd.f32 %v742, %v276
        %745 = vst [vmem:[%s271] sm:$0xff] %v743
        %746 = vst [vmem:[%s271 + $0x8] sm:$0xff] %v744
        %s747 = sand.u32 %s141, 1
        %s748 = scalar_lea.sflag [#allocation5], %s747
        %s749 = sand.u32 %s141, 1
        %s750 = smul.addr %s749, 16
        %s751 = scalar_lea.vmem [#allocation9], %s750
        // Predicated region
        $region53: #{tpu_custom_call.1} parent=39 // pred_check
          %p752 = pneg %p151
        $region54: #{tpu_custom_call.1} parent=39 // pred_check_branch
          %754 = sbr.rel (%p752) target = $region56
        $region55: #{tpu_custom_call.1} parent=39 // pred_region
          %s755 = smul.u32 2, %s23
          %s757 = ssub.s32 256, 256
          %758 = vsyncadd %s748, %s757
          %s759 = smul.addr %s755, 128
          %s760 = scalar_lea.hbm %s5, %s759
          %s761 = sshll.u32 %s751, 4
          %s762 = int_to_ptr.vmem [resolvable:$true] %s761
          %767 = dma.vmem_to_hbm [thread:$0]  %s762, 256, %s760, %s748, 128, 128, 8
        $region56: #{tpu_custom_call.1} parent=39 // pred_fallthru
          _
      $region40: #{tpu_custom_call.1} parent=5 // pred_fallthru
        _
      %p768 = scmp.le.s32.totalorder 2, %s18
      // Predicated region
      $region57: #{tpu_custom_call.1} parent=5 // pred_check
        %p769 = pneg %p768
      $region58: #{tpu_custom_call.1} parent=5 // pred_check_branch
        %771 = sbr.rel (%p769) target = $region60
      $region59: #{tpu_custom_call.1} parent=5 // pred_region
        %s772 = ssub.s32 %s18, 2
        // Predicated region
        $region61: #{tpu_custom_call.1} parent=59 // pred_check
          %p773 = pneg %p157
        $region62: #{tpu_custom_call.1} parent=59 // pred_check_branch
          %775 = sbr.rel (%p773) target = $region64
        $region63: #{tpu_custom_call.1} parent=59 // pred_region
          %s776 = sand.u32 %s142, 1
          %s777 = scalar_lea.sflag [#allocation5], %s776
          %s778 = sand.u32 %s142, 1
          %s779 = smul.addr %s778, 16
          %s780 = scalar_lea.vmem [#allocation9], %s779
          %781 = dma.done %s777, 256
        $region64: #{tpu_custom_call.1} parent=59 // pred_fallthru
          _
      $region60: #{tpu_custom_call.1} parent=5 // pred_fallthru
        _
    $region6: #{tpu_custom_call.1} parent=1 // loop_footer
      %s22 = sadd.s32 1, %s18
    $region7: #{tpu_custom_call.1} parent=1 // loop_footer_branch
      %17 = sbr.rel target = $region3
    $region8: #{tpu_custom_call.1} parent=1 // loop_exit
      _
    %782 = vsyncpa [#allocation4], 1
    %s783 = scalar_lea.sflag [#allocation4], 1
    %784 = vsyncpa %s783, 1
    %785 = vsyncpa [#allocation7], 1
    %786 = vsyncpa [#allocation5], 1
    %s787 = scalar_lea.sflag [#allocation5], 1
    %788 = vsyncpa %s787, 1

</llo_original>
